<compile_context>
chip_gen: v6e
topology: v6e:2x2x1
jax: 0.10.0
libtpu: 0.0.40
codegen_flags: <defaults>
</compile_context>

<pallas_src>
import math
from functools import partial

import jax
import jax.numpy as jnp
from jax import lax
from jax.experimental import pallas as pl
from jax.experimental.pallas import tpu as pltpu


def intermediate_correction_fn(expansion_ratio: float, hidden_size: int) -> int:
    # LLaMA/TokenFormer-style rounding of the FFN width to a multiple of 256.
    intermediate_size = int(expansion_ratio * hidden_size)
    return 256 * ((intermediate_size + 255) // 256)


# --------------------------- in-kernel helpers ---------------------------

_ERF_P = 0.3275911
_ERF_A = (0.254829592, -0.284496736, 1.421413741, -1.453152027, 1.061405429)


def _erf(x):
    # Abramowitz & Stegun 7.1.26 rational approximation (|err| < 1.5e-7), built
    # only from exp / mul / add / select so it lowers on all TPU generations.
    s = jnp.where(x < 0.0, -1.0, 1.0)
    a = jnp.abs(x)
    t = 1.0 / (1.0 + _ERF_P * a)
    a1, a2, a3, a4, a5 = _ERF_A
    poly = t * (a1 + t * (a2 + t * (a3 + t * (a4 + t * a5))))
    return s * (1.0 - poly * jnp.exp(-a * a))


def _gelu_exact(x):
    # Matches PyTorch F.gelu default (exact erf form) to ~1e-7.
    return 0.5 * x * (1.0 + _erf(x * (1.0 / math.sqrt(2.0))))


def _layer_norm(h, g, b, eps=1e-5):
    mu = jnp.mean(h, axis=-1, keepdims=True)
    xc = h - mu
    var = jnp.mean(xc * xc, axis=-1, keepdims=True)
    return xc * lax.rsqrt(var + eps) * g + b


def _pattention(h, kT, vp):
    # h: (S, H) f32/bf16 ; kT: (H, T) bf16 (pre-transposed) ; vp: (T, H) bf16 -> (S, H) f32
    # A = h @ Kp^T ; W = gelu(A) L2-normalized per-row * sqrt(T) ; out = W @ Vp.
    # The per-row L2 scale commutes with the second matmul, so apply it afterwards
    # (cheaper: scale an (S, H) result instead of an (S, T) intermediate).
    T = kT.shape[1]
    a = jnp.dot(h.astype(jnp.bfloat16), kT, preferred_element_type=jnp.float32)    # (S, T)
    g = _gelu_exact(a)                                                             # f32 VPU/EUP
    inv = lax.rsqrt(jnp.sum(g * g, axis=-1, keepdims=True) + 1e-12)                # EUP rsqrt
    out = jnp.dot(g.astype(jnp.bfloat16), vp, preferred_element_type=jnp.float32)  # (S, H)
    return out * (inv * math.sqrt(T))


# ------------------------------- kernel ----------------------------------

def tokenformer_block_kernel(x_ref, g1_ref, b1_ref,
                             kqkv_ref, vq_ref, vk_ref, vv_ref,
                             ko_ref, vo_ref, g2_ref, b2_ref, kf_ref, vf_ref,
                             o_ref, ctx_ref, *, n_heads):
    x = x_ref[0].astype(jnp.float32)   # (S, H); activations arrive bf16 from HBM
    S, H = x.shape
    T = vq_ref.shape[0]
    dh = H // n_heads

    # ---- attention branch: x + MHPA(LN1(x)) ----
    h1 = _layer_norm(x, g1_ref[...], b1_ref[...])

    # Fused q/k/v "A" projection: one (S, H) x (H, 3T) bf16 matmul.
    a_all = jnp.dot(h1.astype(jnp.bfloat16), kqkv_ref[...],
                    preferred_element_type=jnp.float32)               # (S, 3T)

    def _project(sect, vp_ref):
        # gelu + L2-norm only on this section's (S, T) slice (keeps peak live
        # activation to (S,3T) + (S,T) instead of 2x(S,3T)).
        g = _gelu_exact(a_all[:, sect * T:(sect + 1) * T])
        inv = lax.rsqrt(jnp.sum(g * g, axis=-1, keepdims=True) + 1e-12)
        out = jnp.dot(g.astype(jnp.bfloat16), vp_ref[...],
                      preferred_element_type=jnp.float32)             # (S, H)
        return out * (inv * math.sqrt(T))

    q = _project(0, vq_ref)
    k = _project(1, vk_ref)
    v = _project(2, vv_ref)

    # TODO(synk): rotary embeddings not implemented (module default rotary=False).
    # TODO(synk): attention_mask not implemented (forward is exercised with mask=None).

    qb = q.astype(jnp.bfloat16)
    kb = k.astype(jnp.bfloat16)
    vb = v.astype(jnp.bfloat16)
    sm_scale = 1.0 / math.sqrt(dh)

    # Per-head softmax attention; each head's context is written straight into a
    # VMEM scratch (S, H) — no Python-list concat, no relayout copies.
    # TODO(synk): flash-style q-row tiling for large S (v7x 64 MiB VMEM).
    for hd in range(n_heads):          # static unroll over true per-head slices
        lo = hd * dh
        s = lax.dot_general(qb[:, lo:lo + dh], kb[:, lo:lo + dh],
                            (((1,), (1,)), ((), ())),
                            preferred_element_type=jnp.float32) * sm_scale   # (S, S)
        s = s - jnp.max(s, axis=-1, keepdims=True)
        p = jnp.exp(s)                                                       # f32 softmax
        p = p * pl.reciprocal(jnp.sum(p, axis=-1, keepdims=True), approx=True)
        ctx_ref[:, lo:lo + dh] = jnp.dot(
            p.astype(jnp.bfloat16), vb[:, lo:lo + dh],
            preferred_element_type=jnp.float32).astype(ctx_ref.dtype)        # (S, dh)

    attn_out = _pattention(ctx_ref[...], ko_ref[...], vo_ref[...])
    x1 = x + attn_out

    # ---- feed-forward branch: x1 + PAttention_ffn(LN2(x1)) ----
    h2 = _layer_norm(x1, g2_ref[...], b2_ref[...])
    ffn = _pattention(h2, kf_ref[...], vf_ref[...])
    o_ref[0] = (x1 + ffn).astype(o_ref.dtype)


# ------------------------------- wrapper ----------------------------------

def _vmem_limit_bytes():
    # Conservative across generations: v7x per-TensorCore VMEM is 64 MiB and the
    # reported capacity may be per-chip, so only go above 64 MiB when the chip
    # clearly has the 128 MiB VMEM of v5e/v6e; always keep >=16 MiB headroom for
    # Mosaic internal scratch / semaphores.
    try:
        cap = int(pltpu.get_tpu_info().vmem_capacity_bytes)
    except Exception:
        cap = 64 << 20
    if cap >= (120 << 20):                       # v5e / v6e: 128 MiB
        return cap - (16 << 20)
    return max(min(cap, 64 << 20) - (16 << 20), 32 << 20)


def pack_layer_params(p):
    """One-time host-side packing: pre-transpose K matrices (so in-kernel matmuls are
    plain NN, no XLU transpose), fuse Kq/Kk/Kv, and store all Pattention weights as bf16."""
    bf = jnp.bfloat16
    return dict(
        g1=p["g1"], b1=p["b1"], g2=p["g2"], b2=p["b2"],
        kqkv_t=jnp.concatenate([p["kq"].T, p["kk"].T, p["kv"].T], axis=1).astype(bf),  # (H, 3T)
        vq=p["vq"].astype(bf), vk=p["vk"].astype(bf), vv=p["vv"].astype(bf),
        ko_t=p["ko"].T.astype(bf), vo=p["vo"].astype(bf),
        kf_t=p["kf"].T.astype(bf), vf=p["vf"].astype(bf),
    )


def tokenformer_block(x, pp, n_heads):
    B, S, H = x.shape
    assert H % n_heads == 0, "hidden_size must be divisible by n_heads"
    T = pp["vq"].shape[0]
    Tf = pp["vf"].shape[0]

    xmap = lambda b: (b, 0, 0)
    pmap = lambda b: (0, 0)
    # Resident weights: block never changes across the grid -> single-buffer them
    # (default double-buffering would just double their VMEM footprint).
    wspec = lambda r, c: pl.BlockSpec((r, c), pmap, pipeline_mode=pl.Buffered(1))

    in_specs = [
        pl.BlockSpec((1, S, H), xmap),
        wspec(1, H), wspec(1, H),                    # ln1 weight / bias
        wspec(H, 3 * T),                             # fused [Kq | Kk | Kv]^T
        wspec(T, H), wspec(T, H), wspec(T, H),       # Vq Vk Vv
        wspec(H, T), wspec(T, H),                    # Ko^T Vo
        wspec(1, H), wspec(1, H),                    # ln2 weight / bias
        wspec(H, Tf), wspec(Tf, H),                  # Kf^T Vf (FFN)
    ]

    # Advisory cost estimate so XLA schedules the chained per-layer calls sensibly.
    flops = 2 * B * S * H * (8 * T + 2 * S + 2 * Tf)
    transcendentals = B * S * (4 * T + Tf + n_heads * S)
    weight_bytes = sum(int(pp[k].size) * pp[k].dtype.itemsize
                       for k in ("kqkv_t", "vq", "vk", "vv", "ko_t", "vo",
                                 "kf_t", "vf", "g1", "b1", "g2", "b2"))
    act_bytes = 2 * B * S * H * x.dtype.itemsize
    cost = pl.CostEstimate(flops=flops, transcendentals=transcendentals,
                           bytes_accessed=act_bytes + weight_bytes)

    # TODO(synk): when B is small on v7x, add a second "parallel" grid axis (e.g. q
    # tiles) so the second TensorCore gets work; when S < 256, block several batch
    # elements per grid step and fold them into the projection matmuls (MXU fill).
    return pl.pallas_call(
        partial(tokenformer_block_kernel, n_heads=n_heads),
        out_shape=jax.ShapeDtypeStruct((B, S, H), x.dtype),
        grid_spec=pltpu.PrefetchScalarGridSpec(
            num_scalar_prefetch=0,
            grid=(B,),
            in_specs=in_specs,
            out_specs=pl.BlockSpec((1, S, H), xmap),
            scratch_shapes=[pltpu.VMEM((S, H), jnp.bfloat16)],   # per-head ctx
        ),
        compiler_params=pltpu.CompilerParams(
            dimension_semantics=("parallel",),
            vmem_limit_bytes=_vmem_limit_bytes(),
        ),
        cost_estimate=cost,
    )(x, pp["g1"], pp["b1"], pp["kqkv_t"], pp["vq"], pp["vk"], pp["vv"],
      pp["ko_t"], pp["vo"], pp["g2"], pp["b2"], pp["kf_t"], pp["vf"])


def tokenformer_forward(x, layer_params, n_heads, attention_mask=None):
    # TODO(synk): attention_mask path not implemented; forward is run with mask=None.
    orig_dtype = x.dtype
    # Carry activations layer-to-layer as bf16 in HBM (halves activation traffic);
    # all in-kernel math is done in f32.
    h = x.astype(jnp.bfloat16)
    for p in layer_params:
        h = tokenformer_block(h, pack_layer_params(p), n_heads)
    return h.astype(orig_dtype)


# --------------------------- parameter init --------------------------------

def init_tokenformer_params(key, hidden_size, n_layers, expansion_ratio=8.0 / 3.0):
    inter = intermediate_correction_fn(expansion_ratio, hidden_size)

    def xavier(k, n_out, n_in):
        limit = math.sqrt(6.0 / (n_in + n_out))
        return jax.random.uniform(k, (n_out, n_in), jnp.float32, -limit, limit)

    layers = []
    for _ in range(n_layers):
        key, *ks = jax.random.split(key, 11)
        layers.append(dict(
            g1=jnp.ones((1, hidden_size), jnp.float32),
            b1=jnp.zeros((1, hidden_size), jnp.float32),
            kq=xavier(ks[0], hidden_size, hidden_size),
            vq=xavier(ks[1], hidden_size, hidden_size),
            kk=xavier(ks[2], hidden_size, hidden_size),
            vk=xavier(ks[3], hidden_size, hidden_size),
            kv=xavier(ks[4], hidden_size, hidden_size),
            vv=xavier(ks[5], hidden_size, hidden_size),
            ko=xavier(ks[6], hidden_size, hidden_size),
            vo=xavier(ks[7], hidden_size, hidden_size),
            g2=jnp.ones((1, hidden_size), jnp.float32),
            b2=jnp.zeros((1, hidden_size), jnp.float32),
            kf=xavier(ks[8], inter, hidden_size),
            vf=xavier(ks[9], inter, hidden_size),
        ))
    return layers


if __name__ == "__main__":
    B, S, H = 2, 8, 32
    N_HEADS, N_LAYERS = 4, 2

    key = jax.random.PRNGKey(0)
    kx, kp = jax.random.split(key)
    x = jax.random.normal(kx, (B, S, H), jnp.float32)
    params = init_tokenformer_params(kp, H, N_LAYERS)

    out = tokenformer_forward(x, params, N_HEADS, attention_mask=None)
    out = jax.block_until_ready(out)

    assert out.shape == (B, S, H)
    assert bool(jnp.all(jnp.isfinite(out)))
    print("KERNEL_OK")
</pallas_src>

<mosaic_0001>
module attributes {stable_mosaic.version = 11 : i64} {
  func.func @tokenformer_block_kernel(%arg0: i32, %arg1: memref<1x8x32xbf16, #tpu.memory_space<vmem>>, %arg2: memref<1x32xf32, #tpu.memory_space<vmem>>, %arg3: memref<1x32xf32, #tpu.memory_space<vmem>>, %arg4: memref<32x96xbf16, #tpu.memory_space<vmem>>, %arg5: memref<32x32xbf16, #tpu.memory_space<vmem>>, %arg6: memref<32x32xbf16, #tpu.memory_space<vmem>>, %arg7: memref<32x32xbf16, #tpu.memory_space<vmem>>, %arg8: memref<32x32xbf16, #tpu.memory_space<vmem>>, %arg9: memref<32x32xbf16, #tpu.memory_space<vmem>>, %arg10: memref<1x32xf32, #tpu.memory_space<vmem>>, %arg11: memref<1x32xf32, #tpu.memory_space<vmem>>, %arg12: memref<32x256xbf16, #tpu.memory_space<vmem>>, %arg13: memref<256x32xbf16, #tpu.memory_space<vmem>>, %arg14: memref<1x8x32xbf16, #tpu.memory_space<vmem>>, %arg15: memref<8x32xbf16, #tpu.memory_space<vmem>>) attributes {dimension_semantics = [#tpu.dimension_semantics<parallel>], iteration_bounds = array<i64: 2>, scalar_prefetch = 0 : i64, scratch_operands = 1 : i64, tpu.core_type = #tpu.core_type<tc>, window_params = [{transform_indices = @transform_0, window_bounds = array<i64: 1, 8, 32>}, {pipeline_mode = #tpu.pipeline_mode<synchronous>, transform_indices = @transform_1, window_bounds = array<i64: 1, 32>}, {pipeline_mode = #tpu.pipeline_mode<synchronous>, transform_indices = @transform_2, window_bounds = array<i64: 1, 32>}, {pipeline_mode = #tpu.pipeline_mode<synchronous>, transform_indices = @transform_3, window_bounds = array<i64: 32, 96>}, {pipeline_mode = #tpu.pipeline_mode<synchronous>, transform_indices = @transform_4, window_bounds = array<i64: 32, 32>}, {pipeline_mode = #tpu.pipeline_mode<synchronous>, transform_indices = @transform_5, window_bounds = array<i64: 32, 32>}, {pipeline_mode = #tpu.pipeline_mode<synchronous>, transform_indices = @transform_6, window_bounds = array<i64: 32, 32>}, {pipeline_mode = #tpu.pipeline_mode<synchronous>, transform_indices = @transform_7, window_bounds = array<i64: 32, 32>}, {pipeline_mode = #tpu.pipeline_mode<synchronous>, transform_indices = @transform_8, window_bounds = array<i64: 32, 32>}, {pipeline_mode = #tpu.pipeline_mode<synchronous>, transform_indices = @transform_9, window_bounds = array<i64: 1, 32>}, {pipeline_mode = #tpu.pipeline_mode<synchronous>, transform_indices = @transform_10, window_bounds = array<i64: 1, 32>}, {pipeline_mode = #tpu.pipeline_mode<synchronous>, transform_indices = @transform_11, window_bounds = array<i64: 32, 256>}, {pipeline_mode = #tpu.pipeline_mode<synchronous>, transform_indices = @transform_12, window_bounds = array<i64: 256, 32>}, {transform_indices = @transform_13, window_bounds = array<i64: 1, 8, 32>}]} {
    %c0 = arith.constant 0 : index
    %c0_0 = arith.constant 0 : index
    %c0_1 = arith.constant 0 : index
    %0 = vector.load %arg1[%c0, %c0_0, %c0_1] : memref<1x8x32xbf16, #tpu.memory_space<vmem>>, vector<1x8x32xbf16>
    %1 = vector.shape_cast %0 : vector<1x8x32xbf16> to vector<8x32xbf16>
    %2 = arith.extf %1 : vector<8x32xbf16> to vector<8x32xf32>
    %c0_2 = arith.constant 0 : index
    %c0_3 = arith.constant 0 : index
    %3 = vector.load %arg2[%c0_2, %c0_3] : memref<1x32xf32, #tpu.memory_space<vmem>>, vector<1x32xf32>
    %c0_4 = arith.constant 0 : index
    %c0_5 = arith.constant 0 : index
    %4 = vector.load %arg3[%c0_4, %c0_5] : memref<1x32xf32, #tpu.memory_space<vmem>>, vector<1x32xf32>
    %cst = arith.constant dense<0.000000e+00> : vector<8xf32>
    %5 = vector.multi_reduction <add>, %2, %cst [1] : vector<8x32xf32> to vector<8xf32>
    %6 = vector.shape_cast %5 : vector<8xf32> to vector<8x1xf32>
    %cst_6 = arith.constant 3.200000e+01 : f32
    %7 = vector.broadcast %cst_6 : f32 to vector<8x1xf32>
    %8 = arith.divf %6, %7 : vector<8x1xf32>
    %9 = vector.broadcast %8 : vector<8x1xf32> to vector<8x32xf32>
    %10 = arith.subf %2, %9 : vector<8x32xf32>
    %11 = arith.mulf %10, %10 : vector<8x32xf32>
    %cst_7 = arith.constant dense<0.000000e+00> : vector<8xf32>
    %12 = vector.multi_reduction <add>, %11, %cst_7 [1] : vector<8x32xf32> to vector<8xf32>
    %13 = vector.shape_cast %12 : vector<8xf32> to vector<8x1xf32>
    %cst_8 = arith.constant 3.200000e+01 : f32
    %14 = vector.broadcast %cst_8 : f32 to vector<8x1xf32>
    %15 = arith.divf %13, %14 : vector<8x1xf32>
    %cst_9 = arith.constant 9.99999974E-6 : f32
    %16 = vector.broadcast %cst_9 : f32 to vector<8x1xf32>
    %17 = arith.addf %15, %16 : vector<8x1xf32>
    %18 = math.rsqrt %17 : vector<8x1xf32>
    %19 = vector.broadcast %18 : vector<8x1xf32> to vector<8x32xf32>
    %20 = arith.mulf %10, %19 : vector<8x32xf32>
    %21 = vector.broadcast %3 : vector<1x32xf32> to vector<8x32xf32>
    %22 = arith.mulf %20, %21 : vector<8x32xf32>
    %23 = vector.broadcast %4 : vector<1x32xf32> to vector<8x32xf32>
    %24 = arith.addf %22, %23 : vector<8x32xf32>
    %25 = arith.truncf %24 : vector<8x32xf32> to vector<8x32xbf16>
    %c0_10 = arith.constant 0 : index
    %c0_11 = arith.constant 0 : index
    %26 = vector.load %arg4[%c0_10, %c0_11] : memref<32x96xbf16, #tpu.memory_space<vmem>>, vector<32x96xbf16>
    %cst_12 = arith.constant dense<0.000000e+00> : vector<8x96xf32>
    %27 = tpu.matmul %25, %26, %cst_12 {dimension_numbers = #tpu.dot_dimension_numbers<[1], [0], [0], [1], [0, 0, 1, 1], [], []>} : vector<8x32xbf16>, vector<32x96xbf16>, vector<8x96xf32> -> vector<8x96xf32>
    %28 = vector.extract_strided_slice %27 {offsets = [0, 0], sizes = [8, 32], strides = [1, 1]} : vector<8x96xf32> to vector<8x32xf32>
    %cst_13 = arith.constant 5.000000e-01 : f32
    %29 = vector.broadcast %cst_13 : f32 to vector<8x32xf32>
    %30 = arith.mulf %29, %28 : vector<8x32xf32>
    %cst_14 = arith.constant 0.707106769 : f32
    %31 = vector.broadcast %cst_14 : f32 to vector<8x32xf32>
    %32 = arith.mulf %28, %31 : vector<8x32xf32>
    %cst_15 = arith.constant 0.000000e+00 : f32
    %33 = vector.broadcast %cst_15 : f32 to vector<8x32xf32>
    %34 = arith.cmpf olt, %32, %33 : vector<8x32xf32>
    %cst_16 = arith.constant -1.000000e+00 : f32
    %cst_17 = arith.constant 1.000000e+00 : f32
    %35 = vector.broadcast %cst_16 : f32 to vector<8x32xf32>
    %36 = vector.broadcast %cst_17 : f32 to vector<8x32xf32>
    %37 = arith.select %34, %35, %36 : vector<8x32xi1>, vector<8x32xf32>
    %38 = math.absf %32 : vector<8x32xf32>
    %cst_18 = arith.constant 0.327591091 : f32
    %39 = vector.broadcast %cst_18 : f32 to vector<8x32xf32>
    %40 = arith.mulf %39, %38 : vector<8x32xf32>
    %cst_19 = arith.constant 1.000000e+00 : f32
    %41 = vector.broadcast %cst_19 : f32 to vector<8x32xf32>
    %42 = arith.addf %41, %40 : vector<8x32xf32>
    %cst_20 = arith.constant 1.000000e+00 : f32
    %43 = vector.broadcast %cst_20 : f32 to vector<8x32xf32>
    %44 = arith.divf %43, %42 : vector<8x32xf32>
    %cst_21 = arith.constant 1.06140542 : f32
    %45 = vector.broadcast %cst_21 : f32 to vector<8x32xf32>
    %46 = arith.mulf %44, %45 : vector<8x32xf32>
    %cst_22 = arith.constant -1.45315206 : f32
    %47 = vector.broadcast %cst_22 : f32 to vector<8x32xf32>
    %48 = arith.addf %47, %46 : vector<8x32xf32>
    %49 = arith.mulf %44, %48 : vector<8x32xf32>
    %cst_23 = arith.constant 1.42141378 : f32
    %50 = vector.broadcast %cst_23 : f32 to vector<8x32xf32>
    %51 = arith.addf %50, %49 : vector<8x32xf32>
    %52 = arith.mulf %44, %51 : vector<8x32xf32>
    %cst_24 = arith.constant -0.284496725 : f32
    %53 = vector.broadcast %cst_24 : f32 to vector<8x32xf32>
    %54 = arith.addf %53, %52 : vector<8x32xf32>
    %55 = arith.mulf %44, %54 : vector<8x32xf32>
    %cst_25 = arith.constant 0.254829586 : f32
    %56 = vector.broadcast %cst_25 : f32 to vector<8x32xf32>
    %57 = arith.addf %56, %55 : vector<8x32xf32>
    %58 = arith.mulf %44, %57 : vector<8x32xf32>
    %cst_26 = arith.constant 0.000000e+00 : f32
    %59 = vector.broadcast %cst_26 : f32 to vector<8x32xf32>
    %60 = arith.subf %59, %38 : vector<8x32xf32>
    %61 = arith.mulf %60, %38 : vector<8x32xf32>
    %62 = math.exp %61 : vector<8x32xf32>
    %63 = arith.mulf %58, %62 : vector<8x32xf32>
    %cst_27 = arith.constant 1.000000e+00 : f32
    %64 = vector.broadcast %cst_27 : f32 to vector<8x32xf32>
    %65 = arith.subf %64, %63 : vector<8x32xf32>
    %66 = arith.mulf %37, %65 : vector<8x32xf32>
    %cst_28 = arith.constant 1.000000e+00 : f32
    %67 = vector.broadcast %cst_28 : f32 to vector<8x32xf32>
    %68 = arith.addf %67, %66 : vector<8x32xf32>
    %69 = arith.mulf %30, %68 : vector<8x32xf32>
    %70 = arith.mulf %69, %69 : vector<8x32xf32>
    %cst_29 = arith.constant dense<0.000000e+00> : vector<8xf32>
    %71 = vector.multi_reduction <add>, %70, %cst_29 [1] : vector<8x32xf32> to vector<8xf32>
    %72 = vector.shape_cast %71 : vector<8xf32> to vector<8x1xf32>
    %cst_30 = arith.constant 9.99999996E-13 : f32
    %73 = vector.broadcast %cst_30 : f32 to vector<8x1xf32>
    %74 = arith.addf %72, %73 : vector<8x1xf32>
    %75 = math.rsqrt %74 : vector<8x1xf32>
    %76 = arith.truncf %69 : vector<8x32xf32> to vector<8x32xbf16>
    %c0_31 = arith.constant 0 : index
    %c0_32 = arith.constant 0 : index
    %77 = vector.load %arg5[%c0_31, %c0_32] : memref<32x32xbf16, #tpu.memory_space<vmem>>, vector<32x32xbf16>
    %cst_33 = arith.constant dense<0.000000e+00> : vector<8x32xf32>
    %78 = tpu.matmul %76, %77, %cst_33 {dimension_numbers = #tpu.dot_dimension_numbers<[1], [0], [0], [1], [0, 0, 1, 1], [], []>} : vector<8x32xbf16>, vector<32x32xbf16>, vector<8x32xf32> -> vector<8x32xf32>
    %cst_34 = arith.constant 5.65685415 : f32
    %79 = vector.broadcast %cst_34 : f32 to vector<8x1xf32>
    %80 = arith.mulf %75, %79 : vector<8x1xf32>
    %81 = vector.broadcast %80 : vector<8x1xf32> to vector<8x32xf32>
    %82 = arith.mulf %78, %81 : vector<8x32xf32>
    %83 = vector.extract_strided_slice %27 {offsets = [0, 32], sizes = [8, 32], strides = [1, 1]} : vector<8x96xf32> to vector<8x32xf32>
    %cst_35 = arith.constant 5.000000e-01 : f32
    %84 = vector.broadcast %cst_35 : f32 to vector<8x32xf32>
    %85 = arith.mulf %84, %83 : vector<8x32xf32>
    %cst_36 = arith.constant 0.707106769 : f32
    %86 = vector.broadcast %cst_36 : f32 to vector<8x32xf32>
    %87 = arith.mulf %83, %86 : vector<8x32xf32>
    %cst_37 = arith.constant 0.000000e+00 : f32
    %88 = vector.broadcast %cst_37 : f32 to vector<8x32xf32>
    %89 = arith.cmpf olt, %87, %88 : vector<8x32xf32>
    %cst_38 = arith.constant -1.000000e+00 : f32
    %cst_39 = arith.constant 1.000000e+00 : f32
    %90 = vector.broadcast %cst_38 : f32 to vector<8x32xf32>
    %91 = vector.broadcast %cst_39 : f32 to vector<8x32xf32>
    %92 = arith.select %89, %90, %91 : vector<8x32xi1>, vector<8x32xf32>
    %93 = math.absf %87 : vector<8x32xf32>
    %cst_40 = arith.constant 0.327591091 : f32
    %94 = vector.broadcast %cst_40 : f32 to vector<8x32xf32>
    %95 = arith.mulf %94, %93 : vector<8x32xf32>
    %cst_41 = arith.constant 1.000000e+00 : f32
    %96 = vector.broadcast %cst_41 : f32 to vector<8x32xf32>
    %97 = arith.addf %96, %95 : vector<8x32xf32>
    %cst_42 = arith.constant 1.000000e+00 : f32
    %98 = vector.broadcast %cst_42 : f32 to vector<8x32xf32>
    %99 = arith.divf %98, %97 : vector<8x32xf32>
    %cst_43 = arith.constant 1.06140542 : f32
    %100 = vector.broadcast %cst_43 : f32 to vector<8x32xf32>
    %101 = arith.mulf %99, %100 : vector<8x32xf32>
    %cst_44 = arith.constant -1.45315206 : f32
    %102 = vector.broadcast %cst_44 : f32 to vector<8x32xf32>
    %103 = arith.addf %102, %101 : vector<8x32xf32>
    %104 = arith.mulf %99, %103 : vector<8x32xf32>
    %cst_45 = arith.constant 1.42141378 : f32
    %105 = vector.broadcast %cst_45 : f32 to vector<8x32xf32>
    %106 = arith.addf %105, %104 : vector<8x32xf32>
    %107 = arith.mulf %99, %106 : vector<8x32xf32>
    %cst_46 = arith.constant -0.284496725 : f32
    %108 = vector.broadcast %cst_46 : f32 to vector<8x32xf32>
    %109 = arith.addf %108, %107 : vector<8x32xf32>
    %110 = arith.mulf %99, %109 : vector<8x32xf32>
    %cst_47 = arith.constant 0.254829586 : f32
    %111 = vector.broadcast %cst_47 : f32 to vector<8x32xf32>
    %112 = arith.addf %111, %110 : vector<8x32xf32>
    %113 = arith.mulf %99, %112 : vector<8x32xf32>
    %cst_48 = arith.constant 0.000000e+00 : f32
    %114 = vector.broadcast %cst_48 : f32 to vector<8x32xf32>
    %115 = arith.subf %114, %93 : vector<8x32xf32>
    %116 = arith.mulf %115, %93 : vector<8x32xf32>
    %117 = math.exp %116 : vector<8x32xf32>
    %118 = arith.mulf %113, %117 : vector<8x32xf32>
    %cst_49 = arith.constant 1.000000e+00 : f32
    %119 = vector.broadcast %cst_49 : f32 to vector<8x32xf32>
    %120 = arith.subf %119, %118 : vector<8x32xf32>
    %121 = arith.mulf %92, %120 : vector<8x32xf32>
    %cst_50 = arith.constant 1.000000e+00 : f32
    %122 = vector.broadcast %cst_50 : f32 to vector<8x32xf32>
    %123 = arith.addf %122, %121 : vector<8x32xf32>
    %124 = arith.mulf %85, %123 : vector<8x32xf32>
    %125 = arith.mulf %124, %124 : vector<8x32xf32>
    %cst_51 = arith.constant dense<0.000000e+00> : vector<8xf32>
    %126 = vector.multi_reduction <add>, %125, %cst_51 [1] : vector<8x32xf32> to vector<8xf32>
    %127 = vector.shape_cast %126 : vector<8xf32> to vector<8x1xf32>
    %cst_52 = arith.constant 9.99999996E-13 : f32
    %128 = vector.broadcast %cst_52 : f32 to vector<8x1xf32>
    %129 = arith.addf %127, %128 : vector<8x1xf32>
    %130 = math.rsqrt %129 : vector<8x1xf32>
    %131 = arith.truncf %124 : vector<8x32xf32> to vector<8x32xbf16>
    %c0_53 = arith.constant 0 : index
    %c0_54 = arith.constant 0 : index
    %132 = vector.load %arg6[%c0_53, %c0_54] : memref<32x32xbf16, #tpu.memory_space<vmem>>, vector<32x32xbf16>
    %cst_55 = arith.constant dense<0.000000e+00> : vector<8x32xf32>
    %133 = tpu.matmul %131, %132, %cst_55 {dimension_numbers = #tpu.dot_dimension_numbers<[1], [0], [0], [1], [0, 0, 1, 1], [], []>} : vector<8x32xbf16>, vector<32x32xbf16>, vector<8x32xf32> -> vector<8x32xf32>
    %cst_56 = arith.constant 5.65685415 : f32
    %134 = vector.broadcast %cst_56 : f32 to vector<8x1xf32>
    %135 = arith.mulf %130, %134 : vector<8x1xf32>
    %136 = vector.broadcast %135 : vector<8x1xf32> to vector<8x32xf32>
    %137 = arith.mulf %133, %136 : vector<8x32xf32>
    %138 = vector.extract_strided_slice %27 {offsets = [0, 64], sizes = [8, 32], strides = [1, 1]} : vector<8x96xf32> to vector<8x32xf32>
    %cst_57 = arith.constant 5.000000e-01 : f32
    %139 = vector.broadcast %cst_57 : f32 to vector<8x32xf32>
    %140 = arith.mulf %139, %138 : vector<8x32xf32>
    %cst_58 = arith.constant 0.707106769 : f32
    %141 = vector.broadcast %cst_58 : f32 to vector<8x32xf32>
    %142 = arith.mulf %138, %141 : vector<8x32xf32>
    %cst_59 = arith.constant 0.000000e+00 : f32
    %143 = vector.broadcast %cst_59 : f32 to vector<8x32xf32>
    %144 = arith.cmpf olt, %142, %143 : vector<8x32xf32>
    %cst_60 = arith.constant -1.000000e+00 : f32
    %cst_61 = arith.constant 1.000000e+00 : f32
    %145 = vector.broadcast %cst_60 : f32 to vector<8x32xf32>
    %146 = vector.broadcast %cst_61 : f32 to vector<8x32xf32>
    %147 = arith.select %144, %145, %146 : vector<8x32xi1>, vector<8x32xf32>
    %148 = math.absf %142 : vector<8x32xf32>
    %cst_62 = arith.constant 0.327591091 : f32
    %149 = vector.broadcast %cst_62 : f32 to vector<8x32xf32>
    %150 = arith.mulf %149, %148 : vector<8x32xf32>
    %cst_63 = arith.constant 1.000000e+00 : f32
    %151 = vector.broadcast %cst_63 : f32 to vector<8x32xf32>
    %152 = arith.addf %151, %150 : vector<8x32xf32>
    %cst_64 = arith.constant 1.000000e+00 : f32
    %153 = vector.broadcast %cst_64 : f32 to vector<8x32xf32>
    %154 = arith.divf %153, %152 : vector<8x32xf32>
    %cst_65 = arith.constant 1.06140542 : f32
    %155 = vector.broadcast %cst_65 : f32 to vector<8x32xf32>
    %156 = arith.mulf %154, %155 : vector<8x32xf32>
    %cst_66 = arith.constant -1.45315206 : f32
    %157 = vector.broadcast %cst_66 : f32 to vector<8x32xf32>
    %158 = arith.addf %157, %156 : vector<8x32xf32>
    %159 = arith.mulf %154, %158 : vector<8x32xf32>
    %cst_67 = arith.constant 1.42141378 : f32
    %160 = vector.broadcast %cst_67 : f32 to vector<8x32xf32>
    %161 = arith.addf %160, %159 : vector<8x32xf32>
    %162 = arith.mulf %154, %161 : vector<8x32xf32>
    %cst_68 = arith.constant -0.284496725 : f32
    %163 = vector.broadcast %cst_68 : f32 to vector<8x32xf32>
    %164 = arith.addf %163, %162 : vector<8x32xf32>
    %165 = arith.mulf %154, %164 : vector<8x32xf32>
    %cst_69 = arith.constant 0.254829586 : f32
    %166 = vector.broadcast %cst_69 : f32 to vector<8x32xf32>
    %167 = arith.addf %166, %165 : vector<8x32xf32>
    %168 = arith.mulf %154, %167 : vector<8x32xf32>
    %cst_70 = arith.constant 0.000000e+00 : f32
    %169 = vector.broadcast %cst_70 : f32 to vector<8x32xf32>
    %170 = arith.subf %169, %148 : vector<8x32xf32>
    %171 = arith.mulf %170, %148 : vector<8x32xf32>
    %172 = math.exp %171 : vector<8x32xf32>
    %173 = arith.mulf %168, %172 : vector<8x32xf32>
    %cst_71 = arith.constant 1.000000e+00 : f32
    %174 = vector.broadcast %cst_71 : f32 to vector<8x32xf32>
    %175 = arith.subf %174, %173 : vector<8x32xf32>
    %176 = arith.mulf %147, %175 : vector<8x32xf32>
    %cst_72 = arith.constant 1.000000e+00 : f32
    %177 = vector.broadcast %cst_72 : f32 to vector<8x32xf32>
    %178 = arith.addf %177, %176 : vector<8x32xf32>
    %179 = arith.mulf %140, %178 : vector<8x32xf32>
    %180 = arith.mulf %179, %179 : vector<8x32xf32>
    %cst_73 = arith.constant dense<0.000000e+00> : vector<8xf32>
    %181 = vector.multi_reduction <add>, %180, %cst_73 [1] : vector<8x32xf32> to vector<8xf32>
    %182 = vector.shape_cast %181 : vector<8xf32> to vector<8x1xf32>
    %cst_74 = arith.constant 9.99999996E-13 : f32
    %183 = vector.broadcast %cst_74 : f32 to vector<8x1xf32>
    %184 = arith.addf %182, %183 : vector<8x1xf32>
    %185 = math.rsqrt %184 : vector<8x1xf32>
    %186 = arith.truncf %179 : vector<8x32xf32> to vector<8x32xbf16>
    %c0_75 = arith.constant 0 : index
    %c0_76 = arith.constant 0 : index
    %187 = vector.load %arg7[%c0_75, %c0_76] : memref<32x32xbf16, #tpu.memory_space<vmem>>, vector<32x32xbf16>
    %cst_77 = arith.constant dense<0.000000e+00> : vector<8x32xf32>
    %188 = tpu.matmul %186, %187, %cst_77 {dimension_numbers = #tpu.dot_dimension_numbers<[1], [0], [0], [1], [0, 0, 1, 1], [], []>} : vector<8x32xbf16>, vector<32x32xbf16>, vector<8x32xf32> -> vector<8x32xf32>
    %cst_78 = arith.constant 5.65685415 : f32
    %189 = vector.broadcast %cst_78 : f32 to vector<8x1xf32>
    %190 = arith.mulf %185, %189 : vector<8x1xf32>
    %191 = vector.broadcast %190 : vector<8x1xf32> to vector<8x32xf32>
    %192 = arith.mulf %188, %191 : vector<8x32xf32>
    %193 = arith.truncf %82 : vector<8x32xf32> to vector<8x32xbf16>
    %194 = arith.truncf %137 : vector<8x32xf32> to vector<8x32xbf16>
    %195 = arith.truncf %192 : vector<8x32xf32> to vector<8x32xbf16>
    %196 = vector.extract_strided_slice %193 {offsets = [0, 0], sizes = [8, 8], strides = [1, 1]} : vector<8x32xbf16> to vector<8x8xbf16>
    %197 = vector.extract_strided_slice %194 {offsets = [0, 0], sizes = [8, 8], strides = [1, 1]} : vector<8x32xbf16> to vector<8x8xbf16>
    %cst_79 = arith.constant dense<0.000000e+00> : vector<8x8xf32>
    %198 = tpu.matmul %196, %197, %cst_79 {dimension_numbers = #tpu.dot_dimension_numbers<[1], [1], [0], [0], [0, 0, 1, 0], [], []>} : vector<8x8xbf16>, vector<8x8xbf16>, vector<8x8xf32> -> vector<8x8xf32>
    %cst_80 = arith.constant 0.353553385 : f32
    %199 = vector.broadcast %cst_80 : f32 to vector<8x8xf32>
    %200 = arith.mulf %198, %199 : vector<8x8xf32>
    %cst_81 = arith.constant dense<0xFF800000> : vector<8xf32>
    %201 = vector.multi_reduction <maximumf>, %200, %cst_81 [1] : vector<8x8xf32> to vector<8xf32>
    %202 = vector.shape_cast %201 : vector<8xf32> to vector<8x1xf32>
    %203 = vector.broadcast %202 : vector<8x1xf32> to vector<8x8xf32>
    %204 = arith.subf %200, %203 : vector<8x8xf32>
    %205 = math.exp %204 : vector<8x8xf32>
    %cst_82 = arith.constant dense<0.000000e+00> : vector<8xf32>
    %206 = vector.multi_reduction <add>, %205, %cst_82 [1] : vector<8x8xf32> to vector<8xf32>
    %207 = vector.shape_cast %206 : vector<8xf32> to vector<8x1xf32>
    %208 = tpu.reciprocal %207 {approx = true} : vector<8x1xf32> -> vector<8x1xf32>
    %209 = vector.broadcast %208 : vector<8x1xf32> to vector<8x8xf32>
    %210 = arith.mulf %205, %209 : vector<8x8xf32>
    %211 = arith.truncf %210 : vector<8x8xf32> to vector<8x8xbf16>
    %212 = vector.extract_strided_slice %195 {offsets = [0, 0], sizes = [8, 8], strides = [1, 1]} : vector<8x32xbf16> to vector<8x8xbf16>
    %cst_83 = arith.constant dense<0.000000e+00> : vector<8x8xf32>
    %213 = tpu.matmul %211, %212, %cst_83 {dimension_numbers = #tpu.dot_dimension_numbers<[1], [0], [0], [1], [0, 0, 1, 1], [], []>} : vector<8x8xbf16>, vector<8x8xbf16>, vector<8x8xf32> -> vector<8x8xf32>
    %214 = arith.truncf %213 : vector<8x8xf32> to vector<8x8xbf16>
    %c0_84 = arith.constant 0 : index
    %c0_85 = arith.constant 0 : index
    %215 = vector.load %arg15[%c0_84, %c0_85] : memref<8x32xbf16, #tpu.memory_space<vmem>>, vector<8x8xbf16>
    tpu.vector_store %arg15[%c0_84, %c0_85], %214 {strides = array<i32>} : memref<8x32xbf16, #tpu.memory_space<vmem>>, vector<8x8xbf16>,
    %216 = vector.extract_strided_slice %193 {offsets = [0, 8], sizes = [8, 8], strides = [1, 1]} : vector<8x32xbf16> to vector<8x8xbf16>
    %217 = vector.extract_strided_slice %194 {offsets = [0, 8], sizes = [8, 8], strides = [1, 1]} : vector<8x32xbf16> to vector<8x8xbf16>
    %cst_86 = arith.constant dense<0.000000e+00> : vector<8x8xf32>
    %218 = tpu.matmul %216, %217, %cst_86 {dimension_numbers = #tpu.dot_dimension_numbers<[1], [1], [0], [0], [0, 0, 1, 0], [], []>} : vector<8x8xbf16>, vector<8x8xbf16>, vector<8x8xf32> -> vector<8x8xf32>
    %cst_87 = arith.constant 0.353553385 : f32
    %219 = vector.broadcast %cst_87 : f32 to vector<8x8xf32>
    %220 = arith.mulf %218, %219 : vector<8x8xf32>
    %cst_88 = arith.constant dense<0xFF800000> : vector<8xf32>
    %221 = vector.multi_reduction <maximumf>, %220, %cst_88 [1] : vector<8x8xf32> to vector<8xf32>
    %222 = vector.shape_cast %221 : vector<8xf32> to vector<8x1xf32>
    %223 = vector.broadcast %222 : vector<8x1xf32> to vector<8x8xf32>
    %224 = arith.subf %220, %223 : vector<8x8xf32>
    %225 = math.exp %224 : vector<8x8xf32>
    %cst_89 = arith.constant dense<0.000000e+00> : vector<8xf32>
    %226 = vector.multi_reduction <add>, %225, %cst_89 [1] : vector<8x8xf32> to vector<8xf32>
    %227 = vector.shape_cast %226 : vector<8xf32> to vector<8x1xf32>
    %228 = tpu.reciprocal %227 {approx = true} : vector<8x1xf32> -> vector<8x1xf32>
    %229 = vector.broadcast %228 : vector<8x1xf32> to vector<8x8xf32>
    %230 = arith.mulf %225, %229 : vector<8x8xf32>
    %231 = arith.truncf %230 : vector<8x8xf32> to vector<8x8xbf16>
    %232 = vector.extract_strided_slice %195 {offsets = [0, 8], sizes = [8, 8], strides = [1, 1]} : vector<8x32xbf16> to vector<8x8xbf16>
    %cst_90 = arith.constant dense<0.000000e+00> : vector<8x8xf32>
    %233 = tpu.matmul %231, %232, %cst_90 {dimension_numbers = #tpu.dot_dimension_numbers<[1], [0], [0], [1], [0, 0, 1, 1], [], []>} : vector<8x8xbf16>, vector<8x8xbf16>, vector<8x8xf32> -> vector<8x8xf32>
    %234 = arith.truncf %233 : vector<8x8xf32> to vector<8x8xbf16>
    %c0_91 = arith.constant 0 : index
    %c8 = arith.constant 8 : index
    %235 = vector.load %arg15[%c0_91, %c8] : memref<8x32xbf16, #tpu.memory_space<vmem>>, vector<8x8xbf16>
    tpu.vector_store %arg15[%c0_91, %c8], %234 {strides = array<i32>} : memref<8x32xbf16, #tpu.memory_space<vmem>>, vector<8x8xbf16>,
    %236 = vector.extract_strided_slice %193 {offsets = [0, 16], sizes = [8, 8], strides = [1, 1]} : vector<8x32xbf16> to vector<8x8xbf16>
    %237 = vector.extract_strided_slice %194 {offsets = [0, 16], sizes = [8, 8], strides = [1, 1]} : vector<8x32xbf16> to vector<8x8xbf16>
    %cst_92 = arith.constant dense<0.000000e+00> : vector<8x8xf32>
    %238 = tpu.matmul %236, %237, %cst_92 {dimension_numbers = #tpu.dot_dimension_numbers<[1], [1], [0], [0], [0, 0, 1, 0], [], []>} : vector<8x8xbf16>, vector<8x8xbf16>, vector<8x8xf32> -> vector<8x8xf32>
    %cst_93 = arith.constant 0.353553385 : f32
    %239 = vector.broadcast %cst_93 : f32 to vector<8x8xf32>
    %240 = arith.mulf %238, %239 : vector<8x8xf32>
    %cst_94 = arith.constant dense<0xFF800000> : vector<8xf32>
    %241 = vector.multi_reduction <maximumf>, %240, %cst_94 [1] : vector<8x8xf32> to vector<8xf32>
    %242 = vector.shape_cast %241 : vector<8xf32> to vector<8x1xf32>
    %243 = vector.broadcast %242 : vector<8x1xf32> to vector<8x8xf32>
    %244 = arith.subf %240, %243 : vector<8x8xf32>
    %245 = math.exp %244 : vector<8x8xf32>
    %cst_95 = arith.constant dense<0.000000e+00> : vector<8xf32>
    %246 = vector.multi_reduction <add>, %245, %cst_95 [1] : vector<8x8xf32> to vector<8xf32>
    %247 = vector.shape_cast %246 : vector<8xf32> to vector<8x1xf32>
    %248 = tpu.reciprocal %247 {approx = true} : vector<8x1xf32> -> vector<8x1xf32>
    %249 = vector.broadcast %248 : vector<8x1xf32> to vector<8x8xf32>
    %250 = arith.mulf %245, %249 : vector<8x8xf32>
    %251 = arith.truncf %250 : vector<8x8xf32> to vector<8x8xbf16>
    %252 = vector.extract_strided_slice %195 {offsets = [0, 16], sizes = [8, 8], strides = [1, 1]} : vector<8x32xbf16> to vector<8x8xbf16>
    %cst_96 = arith.constant dense<0.000000e+00> : vector<8x8xf32>
    %253 = tpu.matmul %251, %252, %cst_96 {dimension_numbers = #tpu.dot_dimension_numbers<[1], [0], [0], [1], [0, 0, 1, 1], [], []>} : vector<8x8xbf16>, vector<8x8xbf16>, vector<8x8xf32> -> vector<8x8xf32>
    %254 = arith.truncf %253 : vector<8x8xf32> to vector<8x8xbf16>
    %c0_97 = arith.constant 0 : index
    %c16 = arith.constant 16 : index
    %255 = vector.load %arg15[%c0_97, %c16] : memref<8x32xbf16, #tpu.memory_space<vmem>>, vector<8x8xbf16>
    tpu.vector_store %arg15[%c0_97, %c16], %254 {strides = array<i32>} : memref<8x32xbf16, #tpu.memory_space<vmem>>, vector<8x8xbf16>,
    %256 = vector.extract_strided_slice %193 {offsets = [0, 24], sizes = [8, 8], strides = [1, 1]} : vector<8x32xbf16> to vector<8x8xbf16>
    %257 = vector.extract_strided_slice %194 {offsets = [0, 24], sizes = [8, 8], strides = [1, 1]} : vector<8x32xbf16> to vector<8x8xbf16>
    %cst_98 = arith.constant dense<0.000000e+00> : vector<8x8xf32>
    %258 = tpu.matmul %256, %257, %cst_98 {dimension_numbers = #tpu.dot_dimension_numbers<[1], [1], [0], [0], [0, 0, 1, 0], [], []>} : vector<8x8xbf16>, vector<8x8xbf16>, vector<8x8xf32> -> vector<8x8xf32>
    %cst_99 = arith.constant 0.353553385 : f32
    %259 = vector.broadcast %cst_99 : f32 to vector<8x8xf32>
    %260 = arith.mulf %258, %259 : vector<8x8xf32>
    %cst_100 = arith.constant dense<0xFF800000> : vector<8xf32>
    %261 = vector.multi_reduction <maximumf>, %260, %cst_100 [1] : vector<8x8xf32> to vector<8xf32>
    %262 = vector.shape_cast %261 : vector<8xf32> to vector<8x1xf32>
    %263 = vector.broadcast %262 : vector<8x1xf32> to vector<8x8xf32>
    %264 = arith.subf %260, %263 : vector<8x8xf32>
    %265 = math.exp %264 : vector<8x8xf32>
    %cst_101 = arith.constant dense<0.000000e+00> : vector<8xf32>
    %266 = vector.multi_reduction <add>, %265, %cst_101 [1] : vector<8x8xf32> to vector<8xf32>
    %267 = vector.shape_cast %266 : vector<8xf32> to vector<8x1xf32>
    %268 = tpu.reciprocal %267 {approx = true} : vector<8x1xf32> -> vector<8x1xf32>
    %269 = vector.broadcast %268 : vector<8x1xf32> to vector<8x8xf32>
    %270 = arith.mulf %265, %269 : vector<8x8xf32>
    %271 = arith.truncf %270 : vector<8x8xf32> to vector<8x8xbf16>
    %272 = vector.extract_strided_slice %195 {offsets = [0, 24], sizes = [8, 8], strides = [1, 1]} : vector<8x32xbf16> to vector<8x8xbf16>
    %cst_102 = arith.constant dense<0.000000e+00> : vector<8x8xf32>
    %273 = tpu.matmul %271, %272, %cst_102 {dimension_numbers = #tpu.dot_dimension_numbers<[1], [0], [0], [1], [0, 0, 1, 1], [], []>} : vector<8x8xbf16>, vector<8x8xbf16>, vector<8x8xf32> -> vector<8x8xf32>
    %274 = arith.truncf %273 : vector<8x8xf32> to vector<8x8xbf16>
    %c0_103 = arith.constant 0 : index
    %c24 = arith.constant 24 : index
    %275 = vector.load %arg15[%c0_103, %c24] : memref<8x32xbf16, #tpu.memory_space<vmem>>, vector<8x8xbf16>
    tpu.vector_store %arg15[%c0_103, %c24], %274 {strides = array<i32>} : memref<8x32xbf16, #tpu.memory_space<vmem>>, vector<8x8xbf16>,
    %c0_104 = arith.constant 0 : index
    %c0_105 = arith.constant 0 : index
    %276 = vector.load %arg15[%c0_104, %c0_105] : memref<8x32xbf16, #tpu.memory_space<vmem>>, vector<8x32xbf16>
    %c0_106 = arith.constant 0 : index
    %c0_107 = arith.constant 0 : index
    %277 = vector.load %arg8[%c0_106, %c0_107] : memref<32x32xbf16, #tpu.memory_space<vmem>>, vector<32x32xbf16>
    %c0_108 = arith.constant 0 : index
    %c0_109 = arith.constant 0 : index
    %278 = vector.load %arg9[%c0_108, %c0_109] : memref<32x32xbf16, #tpu.memory_space<vmem>>, vector<32x32xbf16>
    %cst_110 = arith.constant dense<0.000000e+00> : vector<8x32xf32>
    %279 = tpu.matmul %276, %277, %cst_110 {dimension_numbers = #tpu.dot_dimension_numbers<[1], [0], [0], [1], [0, 0, 1, 1], [], []>} : vector<8x32xbf16>, vector<32x32xbf16>, vector<8x32xf32> -> vector<8x32xf32>
    %cst_111 = arith.constant 5.000000e-01 : f32
    %280 = vector.broadcast %cst_111 : f32 to vector<8x32xf32>
    %281 = arith.mulf %280, %279 : vector<8x32xf32>
    %cst_112 = arith.constant 0.707106769 : f32
    %282 = vector.broadcast %cst_112 : f32 to vector<8x32xf32>
    %283 = arith.mulf %279, %282 : vector<8x32xf32>
    %cst_113 = arith.constant 0.000000e+00 : f32
    %284 = vector.broadcast %cst_113 : f32 to vector<8x32xf32>
    %285 = arith.cmpf olt, %283, %284 : vector<8x32xf32>
    %cst_114 = arith.constant -1.000000e+00 : f32
    %cst_115 = arith.constant 1.000000e+00 : f32
    %286 = vector.broadcast %cst_114 : f32 to vector<8x32xf32>
    %287 = vector.broadcast %cst_115 : f32 to vector<8x32xf32>
    %288 = arith.select %285, %286, %287 : vector<8x32xi1>, vector<8x32xf32>
    %289 = math.absf %283 : vector<8x32xf32>
    %cst_116 = arith.constant 0.327591091 : f32
    %290 = vector.broadcast %cst_116 : f32 to vector<8x32xf32>
    %291 = arith.mulf %290, %289 : vector<8x32xf32>
    %cst_117 = arith.constant 1.000000e+00 : f32
    %292 = vector.broadcast %cst_117 : f32 to vector<8x32xf32>
    %293 = arith.addf %292, %291 : vector<8x32xf32>
    %cst_118 = arith.constant 1.000000e+00 : f32
    %294 = vector.broadcast %cst_118 : f32 to vector<8x32xf32>
    %295 = arith.divf %294, %293 : vector<8x32xf32>
    %cst_119 = arith.constant 1.06140542 : f32
    %296 = vector.broadcast %cst_119 : f32 to vector<8x32xf32>
    %297 = arith.mulf %295, %296 : vector<8x32xf32>
    %cst_120 = arith.constant -1.45315206 : f32
    %298 = vector.broadcast %cst_120 : f32 to vector<8x32xf32>
    %299 = arith.addf %298, %297 : vector<8x32xf32>
    %300 = arith.mulf %295, %299 : vector<8x32xf32>
    %cst_121 = arith.constant 1.42141378 : f32
    %301 = vector.broadcast %cst_121 : f32 to vector<8x32xf32>
    %302 = arith.addf %301, %300 : vector<8x32xf32>
    %303 = arith.mulf %295, %302 : vector<8x32xf32>
    %cst_122 = arith.constant -0.284496725 : f32
    %304 = vector.broadcast %cst_122 : f32 to vector<8x32xf32>
    %305 = arith.addf %304, %303 : vector<8x32xf32>
    %306 = arith.mulf %295, %305 : vector<8x32xf32>
    %cst_123 = arith.constant 0.254829586 : f32
    %307 = vector.broadcast %cst_123 : f32 to vector<8x32xf32>
    %308 = arith.addf %307, %306 : vector<8x32xf32>
    %309 = arith.mulf %295, %308 : vector<8x32xf32>
    %cst_124 = arith.constant 0.000000e+00 : f32
    %310 = vector.broadcast %cst_124 : f32 to vector<8x32xf32>
    %311 = arith.subf %310, %289 : vector<8x32xf32>
    %312 = arith.mulf %311, %289 : vector<8x32xf32>
    %313 = math.exp %312 : vector<8x32xf32>
    %314 = arith.mulf %309, %313 : vector<8x32xf32>
    %cst_125 = arith.constant 1.000000e+00 : f32
    %315 = vector.broadcast %cst_125 : f32 to vector<8x32xf32>
    %316 = arith.subf %315, %314 : vector<8x32xf32>
    %317 = arith.mulf %288, %316 : vector<8x32xf32>
    %cst_126 = arith.constant 1.000000e+00 : f32
    %318 = vector.broadcast %cst_126 : f32 to vector<8x32xf32>
    %319 = arith.addf %318, %317 : vector<8x32xf32>
    %320 = arith.mulf %281, %319 : vector<8x32xf32>
    %321 = arith.mulf %320, %320 : vector<8x32xf32>
    %cst_127 = arith.constant dense<0.000000e+00> : vector<8xf32>
    %322 = vector.multi_reduction <add>, %321, %cst_127 [1] : vector<8x32xf32> to vector<8xf32>
    %323 = vector.shape_cast %322 : vector<8xf32> to vector<8x1xf32>
    %cst_128 = arith.constant 9.99999996E-13 : f32
    %324 = vector.broadcast %cst_128 : f32 to vector<8x1xf32>
    %325 = arith.addf %323, %324 : vector<8x1xf32>
    %326 = math.rsqrt %325 : vector<8x1xf32>
    %327 = arith.truncf %320 : vector<8x32xf32> to vector<8x32xbf16>
    %cst_129 = arith.constant dense<0.000000e+00> : vector<8x32xf32>
    %328 = tpu.matmul %327, %278, %cst_129 {dimension_numbers = #tpu.dot_dimension_numbers<[1], [0], [0], [1], [0, 0, 1, 1], [], []>} : vector<8x32xbf16>, vector<32x32xbf16>, vector<8x32xf32> -> vector<8x32xf32>
    %cst_130 = arith.constant 5.65685415 : f32
    %329 = vector.broadcast %cst_130 : f32 to vector<8x1xf32>
    %330 = arith.mulf %326, %329 : vector<8x1xf32>
    %331 = vector.broadcast %330 : vector<8x1xf32> to vector<8x32xf32>
    %332 = arith.mulf %328, %331 : vector<8x32xf32>
    %333 = arith.addf %2, %332 : vector<8x32xf32>
    %c0_131 = arith.constant 0 : index
    %c0_132 = arith.constant 0 : index
    %334 = vector.load %arg10[%c0_131, %c0_132] : memref<1x32xf32, #tpu.memory_space<vmem>>, vector<1x32xf32>
    %c0_133 = arith.constant 0 : index
    %c0_134 = arith.constant 0 : index
    %335 = vector.load %arg11[%c0_133, %c0_134] : memref<1x32xf32, #tpu.memory_space<vmem>>, vector<1x32xf32>
    %cst_135 = arith.constant dense<0.000000e+00> : vector<8xf32>
    %336 = vector.multi_reduction <add>, %333, %cst_135 [1] : vector<8x32xf32> to vector<8xf32>
    %337 = vector.shape_cast %336 : vector<8xf32> to vector<8x1xf32>
    %cst_136 = arith.constant 3.200000e+01 : f32
    %338 = vector.broadcast %cst_136 : f32 to vector<8x1xf32>
    %339 = arith.divf %337, %338 : vector<8x1xf32>
    %340 = vector.broadcast %339 : vector<8x1xf32> to vector<8x32xf32>
    %341 = arith.subf %333, %340 : vector<8x32xf32>
    %342 = arith.mulf %341, %341 : vector<8x32xf32>
    %cst_137 = arith.constant dense<0.000000e+00> : vector<8xf32>
    %343 = vector.multi_reduction <add>, %342, %cst_137 [1] : vector<8x32xf32> to vector<8xf32>
    %344 = vector.shape_cast %343 : vector<8xf32> to vector<8x1xf32>
    %cst_138 = arith.constant 3.200000e+01 : f32
    %345 = vector.broadcast %cst_138 : f32 to vector<8x1xf32>
    %346 = arith.divf %344, %345 : vector<8x1xf32>
    %cst_139 = arith.constant 9.99999974E-6 : f32
    %347 = vector.broadcast %cst_139 : f32 to vector<8x1xf32>
    %348 = arith.addf %346, %347 : vector<8x1xf32>
    %349 = math.rsqrt %348 : vector<8x1xf32>
    %350 = vector.broadcast %349 : vector<8x1xf32> to vector<8x32xf32>
    %351 = arith.mulf %341, %350 : vector<8x32xf32>
    %352 = vector.broadcast %334 : vector<1x32xf32> to vector<8x32xf32>
    %353 = arith.mulf %351, %352 : vector<8x32xf32>
    %354 = vector.broadcast %335 : vector<1x32xf32> to vector<8x32xf32>
    %355 = arith.addf %353, %354 : vector<8x32xf32>
    %c0_140 = arith.constant 0 : index
    %c0_141 = arith.constant 0 : index
    %356 = vector.load %arg12[%c0_140, %c0_141] : memref<32x256xbf16, #tpu.memory_space<vmem>>, vector<32x256xbf16>
    %c0_142 = arith.constant 0 : index
    %c0_143 = arith.constant 0 : index
    %357 = vector.load %arg13[%c0_142, %c0_143] : memref<256x32xbf16, #tpu.memory_space<vmem>>, vector<256x32xbf16>
    %358 = arith.truncf %355 : vector<8x32xf32> to vector<8x32xbf16>
    %cst_144 = arith.constant dense<0.000000e+00> : vector<8x256xf32>
    %359 = tpu.matmul %358, %356, %cst_144 {dimension_numbers = #tpu.dot_dimension_numbers<[1], [0], [0], [1], [0, 0, 1, 1], [], []>} : vector<8x32xbf16>, vector<32x256xbf16>, vector<8x256xf32> -> vector<8x256xf32>
    %cst_145 = arith.constant 5.000000e-01 : f32
    %360 = vector.broadcast %cst_145 : f32 to vector<8x256xf32>
    %361 = arith.mulf %360, %359 : vector<8x256xf32>
    %cst_146 = arith.constant 0.707106769 : f32
    %362 = vector.broadcast %cst_146 : f32 to vector<8x256xf32>
    %363 = arith.mulf %359, %362 : vector<8x256xf32>
    %cst_147 = arith.constant 0.000000e+00 : f32
    %364 = vector.broadcast %cst_147 : f32 to vector<8x256xf32>
    %365 = arith.cmpf olt, %363, %364 : vector<8x256xf32>
    %cst_148 = arith.constant -1.000000e+00 : f32
    %cst_149 = arith.constant 1.000000e+00 : f32
    %366 = vector.broadcast %cst_148 : f32 to vector<8x256xf32>
    %367 = vector.broadcast %cst_149 : f32 to vector<8x256xf32>
    %368 = arith.select %365, %366, %367 : vector<8x256xi1>, vector<8x256xf32>
    %369 = math.absf %363 : vector<8x256xf32>
    %cst_150 = arith.constant 0.327591091 : f32
    %370 = vector.broadcast %cst_150 : f32 to vector<8x256xf32>
    %371 = arith.mulf %370, %369 : vector<8x256xf32>
    %cst_151 = arith.constant 1.000000e+00 : f32
    %372 = vector.broadcast %cst_151 : f32 to vector<8x256xf32>
    %373 = arith.addf %372, %371 : vector<8x256xf32>
    %cst_152 = arith.constant 1.000000e+00 : f32
    %374 = vector.broadcast %cst_152 : f32 to vector<8x256xf32>
    %375 = arith.divf %374, %373 : vector<8x256xf32>
    %cst_153 = arith.constant 1.06140542 : f32
    %376 = vector.broadcast %cst_153 : f32 to vector<8x256xf32>
    %377 = arith.mulf %375, %376 : vector<8x256xf32>
    %cst_154 = arith.constant -1.45315206 : f32
    %378 = vector.broadcast %cst_154 : f32 to vector<8x256xf32>
    %379 = arith.addf %378, %377 : vector<8x256xf32>
    %380 = arith.mulf %375, %379 : vector<8x256xf32>
    %cst_155 = arith.constant 1.42141378 : f32
    %381 = vector.broadcast %cst_155 : f32 to vector<8x256xf32>
    %382 = arith.addf %381, %380 : vector<8x256xf32>
    %383 = arith.mulf %375, %382 : vector<8x256xf32>
    %cst_156 = arith.constant -0.284496725 : f32
    %384 = vector.broadcast %cst_156 : f32 to vector<8x256xf32>
    %385 = arith.addf %384, %383 : vector<8x256xf32>
    %386 = arith.mulf %375, %385 : vector<8x256xf32>
    %cst_157 = arith.constant 0.254829586 : f32
    %387 = vector.broadcast %cst_157 : f32 to vector<8x256xf32>
    %388 = arith.addf %387, %386 : vector<8x256xf32>
    %389 = arith.mulf %375, %388 : vector<8x256xf32>
    %cst_158 = arith.constant 0.000000e+00 : f32
    %390 = vector.broadcast %cst_158 : f32 to vector<8x256xf32>
    %391 = arith.subf %390, %369 : vector<8x256xf32>
    %392 = arith.mulf %391, %369 : vector<8x256xf32>
    %393 = math.exp %392 : vector<8x256xf32>
    %394 = arith.mulf %389, %393 : vector<8x256xf32>
    %cst_159 = arith.constant 1.000000e+00 : f32
    %395 = vector.broadcast %cst_159 : f32 to vector<8x256xf32>
    %396 = arith.subf %395, %394 : vector<8x256xf32>
    %397 = arith.mulf %368, %396 : vector<8x256xf32>
    %cst_160 = arith.constant 1.000000e+00 : f32
    %398 = vector.broadcast %cst_160 : f32 to vector<8x256xf32>
    %399 = arith.addf %398, %397 : vector<8x256xf32>
    %400 = arith.mulf %361, %399 : vector<8x256xf32>
    %401 = arith.mulf %400, %400 : vector<8x256xf32>
    %cst_161 = arith.constant dense<0.000000e+00> : vector<8xf32>
    %402 = vector.multi_reduction <add>, %401, %cst_161 [1] : vector<8x256xf32> to vector<8xf32>
    %403 = vector.shape_cast %402 : vector<8xf32> to vector<8x1xf32>
    %cst_162 = arith.constant 9.99999996E-13 : f32
    %404 = vector.broadcast %cst_162 : f32 to vector<8x1xf32>
    %405 = arith.addf %403, %404 : vector<8x1xf32>
    %406 = math.rsqrt %405 : vector<8x1xf32>
    %407 = arith.truncf %400 : vector<8x256xf32> to vector<8x256xbf16>
    %cst_163 = arith.constant dense<0.000000e+00> : vector<8x32xf32>
    %408 = tpu.matmul %407, %357, %cst_163 {dimension_numbers = #tpu.dot_dimension_numbers<[1], [0], [0], [1], [0, 0, 1, 1], [], []>} : vector<8x256xbf16>, vector<256x32xbf16>, vector<8x32xf32> -> vector<8x32xf32>
    %cst_164 = arith.constant 1.600000e+01 : f32
    %409 = vector.broadcast %cst_164 : f32 to vector<8x1xf32>
    %410 = arith.mulf %406, %409 : vector<8x1xf32>
    %411 = vector.broadcast %410 : vector<8x1xf32> to vector<8x32xf32>
    %412 = arith.mulf %408, %411 : vector<8x32xf32>
    %413 = arith.addf %333, %412 : vector<8x32xf32>
    %414 = arith.truncf %413 : vector<8x32xf32> to vector<8x32xbf16>
    %c0_165 = arith.constant 0 : index
    %c0_166 = arith.constant 0 : index
    %c0_167 = arith.constant 0 : index
    %415 = vector.load %arg14[%c0_165, %c0_166, %c0_167] : memref<1x8x32xbf16, #tpu.memory_space<vmem>>, vector<1x8x32xbf16>
    %416 = vector.shape_cast %415 : vector<1x8x32xbf16> to vector<8x32xbf16>
    %417 = vector.shape_cast %414 : vector<8x32xbf16> to vector<1x8x32xbf16>
    tpu.vector_store %arg14[%c0_165, %c0_166, %c0_167], %417 {strides = array<i32>} : memref<1x8x32xbf16, #tpu.memory_space<vmem>>, vector<1x8x32xbf16>,
    return
  }
  func.func @transform_0(%arg0: i32) -> (i32, i32, i32) {
    %c0_i32 = arith.constant 0 : i32
    %c0_i32_0 = arith.constant 0 : i32
    %c0_i32_1 = arith.constant 0 : i32
    return %arg0, %c0_i32, %c0_i32_0 : i32, i32, i32
  }
  func.func @transform_1(%arg0: i32) -> (i32, i32) {
    %c0_i32 = arith.constant 0 : i32
    %c0_i32_0 = arith.constant 0 : i32
    %c0_i32_1 = arith.constant 0 : i32
    return %c0_i32, %c0_i32_0 : i32, i32
  }
  func.func @transform_2(%arg0: i32) -> (i32, i32) {
    %c0_i32 = arith.constant 0 : i32
    %c0_i32_0 = arith.constant 0 : i32
    %c0_i32_1 = arith.constant 0 : i32
    return %c0_i32, %c0_i32_0 : i32, i32
  }
  func.func @transform_3(%arg0: i32) -> (i32, i32) {
    %c0_i32 = arith.constant 0 : i32
    %c0_i32_0 = arith.constant 0 : i32
    %c0_i32_1 = arith.constant 0 : i32
    return %c0_i32, %c0_i32_0 : i32, i32
  }
  func.func @transform_4(%arg0: i32) -> (i32, i32) {
    %c0_i32 = arith.constant 0 : i32
    %c0_i32_0 = arith.constant 0 : i32
    %c0_i32_1 = arith.constant 0 : i32
    return %c0_i32, %c0_i32_0 : i32, i32
  }
  func.func @transform_5(%arg0: i32) -> (i32, i32) {
    %c0_i32 = arith.constant 0 : i32
    %c0_i32_0 = arith.constant 0 : i32
    %c0_i32_1 = arith.constant 0 : i32
    return %c0_i32, %c0_i32_0 : i32, i32
  }
  func.func @transform_6(%arg0: i32) -> (i32, i32) {
    %c0_i32 = arith.constant 0 : i32
    %c0_i32_0 = arith.constant 0 : i32
    %c0_i32_1 = arith.constant 0 : i32
    return %c0_i32, %c0_i32_0 : i32, i32
  }
  func.func @transform_7(%arg0: i32) -> (i32, i32) {
    %c0_i32 = arith.constant 0 : i32
    %c0_i32_0 = arith.constant 0 : i32
    %c0_i32_1 = arith.constant 0 : i32
    return %c0_i32, %c0_i32_0 : i32, i32
  }
  func.func @transform_8(%arg0: i32) -> (i32, i32) {
    %c0_i32 = arith.constant 0 : i32
    %c0_i32_0 = arith.constant 0 : i32
    %c0_i32_1 = arith.constant 0 : i32
    return %c0_i32, %c0_i32_0 : i32, i32
  }
  func.func @transform_9(%arg0: i32) -> (i32, i32) {
    %c0_i32 = arith.constant 0 : i32
    %c0_i32_0 = arith.constant 0 : i32
    %c0_i32_1 = arith.constant 0 : i32
    return %c0_i32, %c0_i32_0 : i32, i32
  }
  func.func @transform_10(%arg0: i32) -> (i32, i32) {
    %c0_i32 = arith.constant 0 : i32
    %c0_i32_0 = arith.constant 0 : i32
    %c0_i32_1 = arith.constant 0 : i32
    return %c0_i32, %c0_i32_0 : i32, i32
  }
  func.func @transform_11(%arg0: i32) -> (i32, i32) {
    %c0_i32 = arith.constant 0 : i32
    %c0_i32_0 = arith.constant 0 : i32
    %c0_i32_1 = arith.constant 0 : i32
    return %c0_i32, %c0_i32_0 : i32, i32
  }
  func.func @transform_12(%arg0: i32) -> (i32, i32) {
    %c0_i32 = arith.constant 0 : i32
    %c0_i32_0 = arith.constant 0 : i32
    %c0_i32_1 = arith.constant 0 : i32
    return %c0_i32, %c0_i32_0 : i32, i32
  }
  func.func @transform_13(%arg0: i32) -> (i32, i32, i32) {
    %c0_i32 = arith.constant 0 : i32
    %c0_i32_0 = arith.constant 0 : i32
    %c0_i32_1 = arith.constant 0 : i32
    return %arg0, %c0_i32, %c0_i32_0 : i32, i32, i32
  }
}

</mosaic_0001>

<llo_original>
// kernel: tpu_custom_call.1
$region0: #{tpu_custom_call.1}
  #allocation0 [shape = 'u32[]', space=smem, size = 0x4, offset = 0x4, fixed_abs, tag = 'smem constant byte address 0x4 - core index']
  #allocation1 [shape = 'u32[144,128]{1,0:T(1,128)}', space=vmem, size = 0x12000, scoped, tag = 'internal scratch']
  #allocation2 [shape = 'bf16[8,32]{1,0:T(8,128)(2,1)}', space=vmem, size = 0x800, scoped, tag = 'scratch operand']
  %s0 = inlined_call_operand.vmem [shape: bf16[2,8,32], index: 0, kind: input, shape index: {}]
  %s1 = inlined_call_operand.vmem [shape: f32[1,32], index: 1, kind: input, shape index: {}]
  %s2 = inlined_call_operand.vmem [shape: f32[1,32], index: 2, kind: input, shape index: {}]
  %s3 = inlined_call_operand.vmem [shape: bf16[32,96], index: 3, kind: input, shape index: {}]
  %s4 = inlined_call_operand.vmem [shape: bf16[32,32], index: 4, kind: input, shape index: {}]
  %s5 = inlined_call_operand.vmem [shape: bf16[32,32], index: 5, kind: input, shape index: {}]
  %s6 = inlined_call_operand.vmem [shape: bf16[32,32], index: 6, kind: input, shape index: {}]
  %s7 = inlined_call_operand.vmem [shape: bf16[32,32], index: 7, kind: input, shape index: {}]
  %s8 = inlined_call_operand.vmem [shape: bf16[32,32], index: 8, kind: input, shape index: {}]
  %s9 = inlined_call_operand.vmem [shape: f32[1,32], index: 9, kind: input, shape index: {}]
  %s10 = inlined_call_operand.vmem [shape: f32[1,32], index: 10, kind: input, shape index: {}]
  %s11 = inlined_call_operand.vmem [shape: bf16[32,256], index: 11, kind: input, shape index: {}]
  %s12 = inlined_call_operand.vmem [shape: bf16[256,32], index: 12, kind: input, shape index: {}]
  %s13 = inlined_call_operand.hbm [shape: bf16[2,8,32], index: 13, kind: output, shape index: {}]
  %s14 = sld [smem:[#allocation0]]
  $region85: #{tpu_custom_call.1} parent=0
    _
  %s16 = ssub.s32 1, %s14
  %s17 = scalar_select 0, %s16, %s14
  $region1: #{tpu_custom_call.1} parent=0
    #allocation3 [shape = 'u8[4096]{0}', space=vmem, size = 0x1000, scoped, tag = 'output window, operand 0']
    #allocation4 [shape = 's32[2]{0}', space=sflag, size = 0x8, scoped, tag = 'scoped memory for tpu_custom_call.1']
    %18 = vsyncpa [#allocation4], 0
    %s19 = scalar_lea.sflag [#allocation4], 1
    %20 = vsyncpa %s19, 0
    loop: start=0, step=1, limit=4
    $region2: #{tpu_custom_call.1} parent=1 // loop_pre_header
      _
    $region3: #{tpu_custom_call.1} parent=1 // loop_header
      %s22 = sphi 0, %s26
      %p23 = scmp.ge.s32.totalorder %s22, 4
      %s32 = sphi 0, %s34
      %s35 = sphi 0, %s32
      %s36 = sphi 0, %s35
      %s52 = sphi 0, %s36
      %s56 = sphi 0, %s56
      %s58 = sphi 0, %s56
      %s59 = sphi 0, %s58
      %s73 = sphi 0, %s59
      %s77 = sphi 0, %s77
      %s79 = sphi 0, %s77
      %s80 = sphi 0, %s79
      %s94 = sphi 0, %s80
      %s98 = sphi 0, %s98
      %s100 = sphi 0, %s98
      %s101 = sphi 0, %s100
      %s115 = sphi 0, %s101
      %s119 = sphi 0, %s119
      %s121 = sphi 0, %s119
      %s122 = sphi 0, %s121
      %s136 = sphi 0, %s122
      %s140 = sphi 0, %s140
      %s142 = sphi 0, %s140
      %s143 = sphi 0, %s142
      %s157 = sphi 0, %s143
      %s161 = sphi 0, %s161
      %s163 = sphi 0, %s161
      %s164 = sphi 0, %s163
      %s178 = sphi 0, %s164
      %s182 = sphi 0, %s182
      %s184 = sphi 0, %s182
      %s185 = sphi 0, %s184
      %s199 = sphi 0, %s185
      %s203 = sphi 0, %s203
      %s205 = sphi 0, %s203
      %s206 = sphi 0, %s205
      %s220 = sphi 0, %s206
      %s224 = sphi 0, %s224
      %s226 = sphi 0, %s224
      %s227 = sphi 0, %s226
      %s241 = sphi 0, %s227
      %s245 = sphi 0, %s245
      %s247 = sphi 0, %s245
      %s248 = sphi 0, %s247
      %s262 = sphi 0, %s248
      %s266 = sphi 0, %s266
      %s268 = sphi 0, %s266
      %s269 = sphi 0, %s268
      %s283 = sphi 0, %s269
      %s287 = sphi 0, %s287
      %s289 = sphi 0, %s287
      %s290 = sphi 0, %s289
      %s304 = sphi 0, %s290
      %s310 = sphi 0, %s312
      %s313 = sphi 0, %s310
      %s314 = sphi 0, %s313
      %s330 = sphi 0, %s314
    $region4: #{tpu_custom_call.1} parent=1 // loop_header_branch
      %25 = sbr.rel (%p23) target = $region8
    $region5: #{tpu_custom_call.1} parent=1 // loop_body
      %s27 = ssub.s32 %s22, 1
      %s28 = ssub.s32 %s22, 2
      %s29 = sadd.s32 %s22, 1
      %s30 = ssub.s32 %s22, %s29
      %p31 = scmp.eq.s32.totalorder %s30, 0
      %s33 = sadd.s32 %s32, 1
      %s34 = scalar_select %p31, %s32, %s33
      %p37 = pneg %p31
      %p38 = scmp.eq.s32.totalorder %s22, 1
      %p39 = por %p37, %p38
      %p40 = scmp.ne.s32.totalorder %s32, %s35
      %p41 = scmp.eq.s32.totalorder %s22, 0
      %p42 = por %p40, %p41
      %p43 = scmp.ne.s32.totalorder %s32, %s35
      %p44 = scmp.eq.s32.totalorder %s27, 1
      %p45 = por %p43, %p44
      %p46 = scmp.ne.s32.totalorder %s35, %s36
      %p47 = scmp.eq.s32.totalorder %s27, 0
      %p48 = por %p46, %p47
      %p49 = scmp.ne.s32.totalorder %s35, %s36
      %p50 = scmp.eq.s32.totalorder %s28, 1
      %p51 = por %p49, %p50
      %p53 = scmp.ne.s32.totalorder %s36, %s52
      %p54 = scmp.eq.s32.totalorder %s28, 0
      %p55 = por %p53, %p54
      %s57 = sadd.s32 %s56, 1
      %p60 = scmp.eq.s32.totalorder %s22, 1
      %p61 = scmp.ne.s32.totalorder %s56, %s58
      %p62 = scmp.eq.s32.totalorder %s22, 0
      %p63 = por %p61, %p62
      %p64 = scmp.ne.s32.totalorder %s56, %s58
      %p65 = scmp.eq.s32.totalorder %s27, 1
      %p66 = por %p64, %p65
      %p67 = scmp.ne.s32.totalorder %s58, %s59
      %p68 = scmp.eq.s32.totalorder %s27, 0
      %p69 = por %p67, %p68
      %p70 = scmp.ne.s32.totalorder %s58, %s59
      %p71 = scmp.eq.s32.totalorder %s28, 1
      %p72 = por %p70, %p71
      %p74 = scmp.ne.s32.totalorder %s59, %s73
      %p75 = scmp.eq.s32.totalorder %s28, 0
      %p76 = por %p74, %p75
      %s78 = sadd.s32 %s77, 1
      %p81 = scmp.eq.s32.totalorder %s22, 1
      %p82 = scmp.ne.s32.totalorder %s77, %s79
      %p83 = scmp.eq.s32.totalorder %s22, 0
      %p84 = por %p82, %p83
      %p85 = scmp.ne.s32.totalorder %s77, %s79
      %p86 = scmp.eq.s32.totalorder %s27, 1
      %p87 = por %p85, %p86
      %p88 = scmp.ne.s32.totalorder %s79, %s80
      %p89 = scmp.eq.s32.totalorder %s27, 0
      %p90 = por %p88, %p89
      %p91 = scmp.ne.s32.totalorder %s79, %s80
      %p92 = scmp.eq.s32.totalorder %s28, 1
      %p93 = por %p91, %p92
      %p95 = scmp.ne.s32.totalorder %s80, %s94
      %p96 = scmp.eq.s32.totalorder %s28, 0
      %p97 = por %p95, %p96
      %s99 = sadd.s32 %s98, 1
      %p102 = scmp.eq.s32.totalorder %s22, 1
      %p103 = scmp.ne.s32.totalorder %s98, %s100
      %p104 = scmp.eq.s32.totalorder %s22, 0
      %p105 = por %p103, %p104
      %p106 = scmp.ne.s32.totalorder %s98, %s100
      %p107 = scmp.eq.s32.totalorder %s27, 1
      %p108 = por %p106, %p107
      %p109 = scmp.ne.s32.totalorder %s100, %s101
      %p110 = scmp.eq.s32.totalorder %s27, 0
      %p111 = por %p109, %p110
      %p112 = scmp.ne.s32.totalorder %s100, %s101
      %p113 = scmp.eq.s32.totalorder %s28, 1
      %p114 = por %p112, %p113
      %p116 = scmp.ne.s32.totalorder %s101, %s115
      %p117 = scmp.eq.s32.totalorder %s28, 0
      %p118 = por %p116, %p117
      %s120 = sadd.s32 %s119, 1
      %p123 = scmp.eq.s32.totalorder %s22, 1
      %p124 = scmp.ne.s32.totalorder %s119, %s121
      %p125 = scmp.eq.s32.totalorder %s22, 0
      %p126 = por %p124, %p125
      %p127 = scmp.ne.s32.totalorder %s119, %s121
      %p128 = scmp.eq.s32.totalorder %s27, 1
      %p129 = por %p127, %p128
      %p130 = scmp.ne.s32.totalorder %s121, %s122
      %p131 = scmp.eq.s32.totalorder %s27, 0
      %p132 = por %p130, %p131
      %p133 = scmp.ne.s32.totalorder %s121, %s122
      %p134 = scmp.eq.s32.totalorder %s28, 1
      %p135 = por %p133, %p134
      %p137 = scmp.ne.s32.totalorder %s122, %s136
      %p138 = scmp.eq.s32.totalorder %s28, 0
      %p139 = por %p137, %p138
      %s141 = sadd.s32 %s140, 1
      %p144 = scmp.eq.s32.totalorder %s22, 1
      %p145 = scmp.ne.s32.totalorder %s140, %s142
      %p146 = scmp.eq.s32.totalorder %s22, 0
      %p147 = por %p145, %p146
      %p148 = scmp.ne.s32.totalorder %s140, %s142
      %p149 = scmp.eq.s32.totalorder %s27, 1
      %p150 = por %p148, %p149
      %p151 = scmp.ne.s32.totalorder %s142, %s143
      %p152 = scmp.eq.s32.totalorder %s27, 0
      %p153 = por %p151, %p152
      %p154 = scmp.ne.s32.totalorder %s142, %s143
      %p155 = scmp.eq.s32.totalorder %s28, 1
      %p156 = por %p154, %p155
      %p158 = scmp.ne.s32.totalorder %s143, %s157
      %p159 = scmp.eq.s32.totalorder %s28, 0
      %p160 = por %p158, %p159
      %s162 = sadd.s32 %s161, 1
      %p165 = scmp.eq.s32.totalorder %s22, 1
      %p166 = scmp.ne.s32.totalorder %s161, %s163
      %p167 = scmp.eq.s32.totalorder %s22, 0
      %p168 = por %p166, %p167
      %p169 = scmp.ne.s32.totalorder %s161, %s163
      %p170 = scmp.eq.s32.totalorder %s27, 1
      %p171 = por %p169, %p170
      %p172 = scmp.ne.s32.totalorder %s163, %s164
      %p173 = scmp.eq.s32.totalorder %s27, 0
      %p174 = por %p172, %p173
      %p175 = scmp.ne.s32.totalorder %s163, %s164
      %p176 = scmp.eq.s32.totalorder %s28, 1
      %p177 = por %p175, %p176
      %p179 = scmp.ne.s32.totalorder %s164, %s178
      %p180 = scmp.eq.s32.totalorder %s28, 0
      %p181 = por %p179, %p180
      %s183 = sadd.s32 %s182, 1
      %p186 = scmp.eq.s32.totalorder %s22, 1
      %p187 = scmp.ne.s32.totalorder %s182, %s184
      %p188 = scmp.eq.s32.totalorder %s22, 0
      %p189 = por %p187, %p188
      %p190 = scmp.ne.s32.totalorder %s182, %s184
      %p191 = scmp.eq.s32.totalorder %s27, 1
      %p192 = por %p190, %p191
      %p193 = scmp.ne.s32.totalorder %s184, %s185
      %p194 = scmp.eq.s32.totalorder %s27, 0
      %p195 = por %p193, %p194
      %p196 = scmp.ne.s32.totalorder %s184, %s185
      %p197 = scmp.eq.s32.totalorder %s28, 1
      %p198 = por %p196, %p197
      %p200 = scmp.ne.s32.totalorder %s185, %s199
      %p201 = scmp.eq.s32.totalorder %s28, 0
      %p202 = por %p200, %p201
      %s204 = sadd.s32 %s203, 1
      %p207 = scmp.eq.s32.totalorder %s22, 1
      %p208 = scmp.ne.s32.totalorder %s203, %s205
      %p209 = scmp.eq.s32.totalorder %s22, 0
      %p210 = por %p208, %p209
      %p211 = scmp.ne.s32.totalorder %s203, %s205
      %p212 = scmp.eq.s32.totalorder %s27, 1
      %p213 = por %p211, %p212
      %p214 = scmp.ne.s32.totalorder %s205, %s206
      %p215 = scmp.eq.s32.totalorder %s27, 0
      %p216 = por %p214, %p215
      %p217 = scmp.ne.s32.totalorder %s205, %s206
      %p218 = scmp.eq.s32.totalorder %s28, 1
      %p219 = por %p217, %p218
      %p221 = scmp.ne.s32.totalorder %s206, %s220
      %p222 = scmp.eq.s32.totalorder %s28, 0
      %p223 = por %p221, %p222
      %s225 = sadd.s32 %s224, 1
      %p228 = scmp.eq.s32.totalorder %s22, 1
      %p229 = scmp.ne.s32.totalorder %s224, %s226
      %p230 = scmp.eq.s32.totalorder %s22, 0
      %p231 = por %p229, %p230
      %p232 = scmp.ne.s32.totalorder %s224, %s226
      %p233 = scmp.eq.s32.totalorder %s27, 1
      %p234 = por %p232, %p233
      %p235 = scmp.ne.s32.totalorder %s226, %s227
      %p236 = scmp.eq.s32.totalorder %s27, 0
      %p237 = por %p235, %p236
      %p238 = scmp.ne.s32.totalorder %s226, %s227
      %p239 = scmp.eq.s32.totalorder %s28, 1
      %p240 = por %p238, %p239
      %p242 = scmp.ne.s32.totalorder %s227, %s241
      %p243 = scmp.eq.s32.totalorder %s28, 0
      %p244 = por %p242, %p243
      %s246 = sadd.s32 %s245, 1
      %p249 = scmp.eq.s32.totalorder %s22, 1
      %p250 = scmp.ne.s32.totalorder %s245, %s247
      %p251 = scmp.eq.s32.totalorder %s22, 0
      %p252 = por %p250, %p251
      %p253 = scmp.ne.s32.totalorder %s245, %s247
      %p254 = scmp.eq.s32.totalorder %s27, 1
      %p255 = por %p253, %p254
      %p256 = scmp.ne.s32.totalorder %s247, %s248
      %p257 = scmp.eq.s32.totalorder %s27, 0
      %p258 = por %p256, %p257
      %p259 = scmp.ne.s32.totalorder %s247, %s248
      %p260 = scmp.eq.s32.totalorder %s28, 1
      %p261 = por %p259, %p260
      %p263 = scmp.ne.s32.totalorder %s248, %s262
      %p264 = scmp.eq.s32.totalorder %s28, 0
      %p265 = por %p263, %p264
      %s267 = sadd.s32 %s266, 1
      %p270 = scmp.eq.s32.totalorder %s22, 1
      %p271 = scmp.ne.s32.totalorder %s266, %s268
      %p272 = scmp.eq.s32.totalorder %s22, 0
      %p273 = por %p271, %p272
      %p274 = scmp.ne.s32.totalorder %s266, %s268
      %p275 = scmp.eq.s32.totalorder %s27, 1
      %p276 = por %p274, %p275
      %p277 = scmp.ne.s32.totalorder %s268, %s269
      %p278 = scmp.eq.s32.totalorder %s27, 0
      %p279 = por %p277, %p278
      %p280 = scmp.ne.s32.totalorder %s268, %s269
      %p281 = scmp.eq.s32.totalorder %s28, 1
      %p282 = por %p280, %p281
      %p284 = scmp.ne.s32.totalorder %s269, %s283
      %p285 = scmp.eq.s32.totalorder %s28, 0
      %p286 = por %p284, %p285
      %s288 = sadd.s32 %s287, 1
      %p291 = scmp.eq.s32.totalorder %s22, 1
      %p292 = scmp.ne.s32.totalorder %s287, %s289
      %p293 = scmp.eq.s32.totalorder %s22, 0
      %p294 = por %p292, %p293
      %p295 = scmp.ne.s32.totalorder %s287, %s289
      %p296 = scmp.eq.s32.totalorder %s27, 1
      %p297 = por %p295, %p296
      %p298 = scmp.ne.s32.totalorder %s289, %s290
      %p299 = scmp.eq.s32.totalorder %s27, 0
      %p300 = por %p298, %p299
      %p301 = scmp.ne.s32.totalorder %s289, %s290
      %p302 = scmp.eq.s32.totalorder %s28, 1
      %p303 = por %p301, %p302
      %p305 = scmp.ne.s32.totalorder %s290, %s304
      %p306 = scmp.eq.s32.totalorder %s28, 0
      %p307 = por %p305, %p306
      %s308 = ssub.s32 %s22, %s29
      %p309 = scmp.eq.s32.totalorder %s308, 0
      %s311 = sadd.s32 %s310, 1
      %s312 = scalar_select %p309, %s310, %s311
      %p315 = pneg %p309
      %p316 = scmp.eq.s32.totalorder %s22, 1
      %p317 = por %p315, %p316
      %p318 = scmp.ne.s32.totalorder %s310, %s313
      %p319 = scmp.eq.s32.totalorder %s22, 0
      %p320 = por %p318, %p319
      %p321 = scmp.ne.s32.totalorder %s310, %s313
      %p322 = scmp.eq.s32.totalorder %s27, 1
      %p323 = por %p321, %p322
      %p324 = scmp.ne.s32.totalorder %s313, %s314
      %p325 = scmp.eq.s32.totalorder %s27, 0
      %p326 = por %p324, %p325
      %p327 = scmp.ne.s32.totalorder %s313, %s314
      %p328 = scmp.eq.s32.totalorder %s28, 1
      %p329 = por %p327, %p328
      %p331 = scmp.ne.s32.totalorder %s314, %s330
      %p332 = scmp.eq.s32.totalorder %s28, 0
      %p333 = por %p331, %p332
      %p334 = scmp.le.s32.totalorder 1, %s22
      %p335 = scmp.lt.s32.totalorder %s22, 3
      %p336 = pnand %p334, %p335
      %p337 = pneg %p336
      // Predicated region
      $region9: #{tpu_custom_call.1} parent=5 // pred_check
        _
      $region10: #{tpu_custom_call.1} parent=5 // pred_check_branch
        %339 = sbr.rel (%p336) target = $region12
      $region11: #{tpu_custom_call.1} parent=5 // pred_region
        %s340 = ssub.s32 %s22, 1
        // Predicated region
        $region13: #{tpu_custom_call.1} parent=11 // pred_check
          %p341 = pneg %p69
        $region14: #{tpu_custom_call.1} parent=11 // pred_check_branch
          %343 = sbr.rel (%p341) target = $region16
        $region15: #{tpu_custom_call.1} parent=11 // pred_region
          _
        $region16: #{tpu_custom_call.1} parent=11 // pred_fallthru
          _
        // Predicated region
        $region17: #{tpu_custom_call.1} parent=11 // pred_check
          %p344 = pneg %p90
        $region18: #{tpu_custom_call.1} parent=11 // pred_check_branch
          %346 = sbr.rel (%p344) target = $region20
        $region19: #{tpu_custom_call.1} parent=11 // pred_region
          _
        $region20: #{tpu_custom_call.1} parent=11 // pred_fallthru
          _
        // Predicated region
        $region21: #{tpu_custom_call.1} parent=11 // pred_check
          %p347 = pneg %p111
        $region22: #{tpu_custom_call.1} parent=11 // pred_check_branch
          %349 = sbr.rel (%p347) target = $region24
        $region23: #{tpu_custom_call.1} parent=11 // pred_region
          _
        $region24: #{tpu_custom_call.1} parent=11 // pred_fallthru
          _
        // Predicated region
        $region25: #{tpu_custom_call.1} parent=11 // pred_check
          %p350 = pneg %p132
        $region26: #{tpu_custom_call.1} parent=11 // pred_check_branch
          %352 = sbr.rel (%p350) target = $region28
        $region27: #{tpu_custom_call.1} parent=11 // pred_region
          _
        $region28: #{tpu_custom_call.1} parent=11 // pred_fallthru
          _
        // Predicated region
        $region29: #{tpu_custom_call.1} parent=11 // pred_check
          %p353 = pneg %p153
        $region30: #{tpu_custom_call.1} parent=11 // pred_check_branch
          %355 = sbr.rel (%p353) target = $region32
        $region31: #{tpu_custom_call.1} parent=11 // pred_region
          _
        $region32: #{tpu_custom_call.1} parent=11 // pred_fallthru
          _
        // Predicated region
        $region33: #{tpu_custom_call.1} parent=11 // pred_check
          %p356 = pneg %p174
        $region34: #{tpu_custom_call.1} parent=11 // pred_check_branch
          %358 = sbr.rel (%p356) target = $region36
        $region35: #{tpu_custom_call.1} parent=11 // pred_region
          _
        $region36: #{tpu_custom_call.1} parent=11 // pred_fallthru
          _
        // Predicated region
        $region37: #{tpu_custom_call.1} parent=11 // pred_check
          %p359 = pneg %p195
        $region38: #{tpu_custom_call.1} parent=11 // pred_check_branch
          %361 = sbr.rel (%p359) target = $region40
        $region39: #{tpu_custom_call.1} parent=11 // pred_region
          _
        $region40: #{tpu_custom_call.1} parent=11 // pred_fallthru
          _
        // Predicated region
        $region41: #{tpu_custom_call.1} parent=11 // pred_check
          %p362 = pneg %p216
        $region42: #{tpu_custom_call.1} parent=11 // pred_check_branch
          %364 = sbr.rel (%p362) target = $region44
        $region43: #{tpu_custom_call.1} parent=11 // pred_region
          _
        $region44: #{tpu_custom_call.1} parent=11 // pred_fallthru
          _
        // Predicated region
        $region45: #{tpu_custom_call.1} parent=11 // pred_check
          %p365 = pneg %p237
        $region46: #{tpu_custom_call.1} parent=11 // pred_check_branch
          %367 = sbr.rel (%p365) target = $region48
        $region47: #{tpu_custom_call.1} parent=11 // pred_region
          _
        $region48: #{tpu_custom_call.1} parent=11 // pred_fallthru
          _
        // Predicated region
        $region49: #{tpu_custom_call.1} parent=11 // pred_check
          %p368 = pneg %p258
        $region50: #{tpu_custom_call.1} parent=11 // pred_check_branch
          %370 = sbr.rel (%p368) target = $region52
        $region51: #{tpu_custom_call.1} parent=11 // pred_region
          _
        $region52: #{tpu_custom_call.1} parent=11 // pred_fallthru
          _
        // Predicated region
        $region53: #{tpu_custom_call.1} parent=11 // pred_check
          %p371 = pneg %p279
        $region54: #{tpu_custom_call.1} parent=11 // pred_check_branch
          %373 = sbr.rel (%p371) target = $region56
        $region55: #{tpu_custom_call.1} parent=11 // pred_region
          _
        $region56: #{tpu_custom_call.1} parent=11 // pred_fallthru
          _
        // Predicated region
        $region57: #{tpu_custom_call.1} parent=11 // pred_check
          %p374 = pneg %p300
        $region58: #{tpu_custom_call.1} parent=11 // pred_check_branch
          %376 = sbr.rel (%p374) target = $region60
        $region59: #{tpu_custom_call.1} parent=11 // pred_region
          _
        $region60: #{tpu_custom_call.1} parent=11 // pred_fallthru
          _
      $region12: #{tpu_custom_call.1} parent=5 // pred_fallthru
        _
      %p377 = scmp.lt.s32.totalorder %s22, 2
      // Predicated region
      $region61: #{tpu_custom_call.1} parent=5 // pred_check
        %p378 = pneg %p377
      $region62: #{tpu_custom_call.1} parent=5 // pred_check_branch
        %380 = sbr.rel (%p378) target = $region64
      $region63: #{tpu_custom_call.1} parent=5 // pred_region
        // Predicated region
        $region65: #{tpu_custom_call.1} parent=63 // pred_check
          %p381 = pneg %p42
        $region66: #{tpu_custom_call.1} parent=63 // pred_check_branch
          %383 = sbr.rel (%p381) target = $region68
        $region67: #{tpu_custom_call.1} parent=63 // pred_region
          %p384 = scmp.lt.s32.totalorder %s22, 1
          %s385 = scalar_select %p384, %s22, 1
          %s386 = smul.addr %s385, 4
          %s387 = scalar_lea.vmem %s0, %s386
        $region68: #{tpu_custom_call.1} parent=63 // pred_fallthru
          _
      $region64: #{tpu_custom_call.1} parent=5 // pred_fallthru
        _
      %p388 = scmp.le.s32.totalorder 1, %s22
      %p389 = scmp.lt.s32.totalorder %s22, 3
      %p390 = pnand %p388, %p389
      %p391 = pneg %p390
      // Predicated region
      $region69: #{tpu_custom_call.1} parent=5 // pred_check
        _
      $region70: #{tpu_custom_call.1} parent=5 // pred_check_branch
        %393 = sbr.rel (%p390) target = $region72
      $region71: #{tpu_custom_call.1} parent=5 // pred_region
        %s394 = ssub.s32 %s22, 1
        %p395 = scmp.lt.s32.totalorder %s27, 1
        %s396 = scalar_select %p395, %s27, 1
        %s397 = smul.addr %s396, 4
        %s398 = scalar_lea.vmem %s0, %s397
        %p399 = pneg %p48
        %p400 = pneg %p45
        %p401 = pneg %p69
        %p402 = pneg %p66
        %p403 = pneg %p90
        %p404 = pneg %p87
        %p405 = pneg %p111
        %p406 = pneg %p108
        %p407 = pneg %p132
        %p408 = pneg %p129
        %p409 = pneg %p153
        %p410 = pneg %p150
        %p411 = pneg %p174
        %p412 = pneg %p171
        %p413 = pneg %p195
        %p414 = pneg %p192
        %p415 = pneg %p216
        %p416 = pneg %p213
        %p417 = pneg %p237
        %p418 = pneg %p234
        %p419 = pneg %p258
        %p420 = pneg %p255
        %p421 = pneg %p279
        %p422 = pneg %p276
        %p423 = pneg %p300
        %p424 = pneg %p297
        %p425 = pneg %p326
        %p426 = pneg %p323
        %s427 = sand.u32 %s313, 1
        %s428 = scalar_lea.sflag [#allocation4], %s427
        %s429 = sand.u32 %s313, 1
        %s430 = smul.addr %s429, 4
        %s431 = scalar_lea.vmem [#allocation3], %s430
        %p432 = scmp.lt.s32.totalorder %s27, 1
        %s433 = scalar_select %p432, %s27, 1
        %s434 = smul.addr %s433, 4
        %s435 = scalar_lea.vmem %s0, %s434
        %v437 = vld [vmem:[%s435] sm:$0xf]
        %v438 = vunpack.c.l.bf16 %v437
        %v439 = vld [vmem:[%s1] sm:$0x1]
        %v440 = vld [vmem:[%s2] sm:$0x1]
        %vm441 = vcmask 261120
        %v442 = vsel %vm441, %v438, 0.0
        %443 = vadd.xlane.f32.xlu0 %v442
        %v444 = vpop.xlane.xlu0 %443
        %v445 = vrcp.pop 32.0
        %v446 = vmul.f32 %v444, %v445
        %v447 = vsub.f32 %v438, %v446
        %v448 = vmul.f32 %v447, %v447
        %v449 = vsel %vm441, %v448, 0.0
        %450 = vadd.xlane.f32.xlu0 %v449
        %v451 = vpop.xlane.xlu0 %450
        %v452 = vmul.f32 %v451, %v445
        %v453 = vadd.f32 %v452, 1e-05
        %v454 = vrsqrt.pop %v453
        %v455 = vmul.f32 %v447, %v454
        %v457 = vlaneseq
        %v458 = vshrl.u32 %v457, 7
        %v459 = vsub.s32 0, %v458
        %v460 = vrot.slane %v439, %v459
        %v462 = vmul.f32 %v455, %v460
        %v464 = vlaneseq
        %v465 = vshrl.u32 %v464, 7
        %v466 = vsub.s32 0, %v465
        %v467 = vrot.slane %v440, %v466
        %v469 = vadd.f32 %v462, %v467
        %v470 = vpack.c.bf16 %v469, %v469
        %v471 = vld [vmem:[%s3] sm:$0xf]
        %v472 = vld [vmem:[%s3 + $0x4] sm:$0xf]
        %v473 = vld [vmem:[%s3 + $0x8] sm:$0xf]
        %v474 = vld [vmem:[%s3 + $0xc] sm:$0xf]
        %v479 = vunpack.c.l.b16 %v471
        %v480 = vunpack.c.l.b16 %v472
        %v481 = vunpack.c.l.b16 %v473
        %v482 = vunpack.c.l.b16 %v474
        %v483 = vpack.c.b16 %v480, %v479
        %v484 = vpack.c.b16 %v482, %v481
        %v488 = vsel %vm441, %v470, 0
        %490 = vmatprep.subr.bf16.mxu0 0
        %491 = vmatpush1.bf16.msra.mxu0 0
        %492 = vmatprep.subr.bf16.mxu0 0
        %493 = vmatpush1.bf16.msra.mxu0 0
        %494 = vmatprep.subr.bf16.mxu0 0
        %495 = vmatpush1.bf16.msra.mxu0 0
        %496 = vmatprep.subr.bf16.mxu0 0
        %497 = vmatpush1.bf16.msra.mxu0 0
        %498 = vmatprep.subr.bf16.mxu0 0
        %499 = vmatpush1.bf16.msra.mxu0 0
        %500 = vmatprep.subr.bf16.mxu0 0
        %501 = vmatpush1.bf16.msra.mxu0 0
        %502 = vmatprep.subr.bf16.mxu0 0
        %503 = vmatpush1.bf16.msra.mxu0 %v484
        %504 = vmatprep.subr.bf16.mxu0 0
        %505 = vmatpush1.bf16.msra.mxu0 %v483
        %506 = vmatprep.subr.bf16.mxu0 0
        %507 = vmatpush2.bf16.msra.mxu0 0
        %508 = vmatprep.subr.bf16.mxu0 0
        %509 = vmatpush2.bf16.msra.mxu0 0
        %510 = vmatprep.subr.bf16.mxu0 0
        %511 = vmatpush2.bf16.msra.mxu0 0
        %512 = vmatprep.subr.bf16.mxu0 0
        %513 = vmatpush2.bf16.msra.mxu0 0
        %514 = vmatprep.subr.bf16.mxu0 0
        %515 = vmatpush2.bf16.msra.mxu0 0
        %516 = vmatprep.subr.bf16.mxu0 0
        %517 = vmatpush2.bf16.msra.mxu0 0
        %518 = vmatprep.subr.bf16.mxu0 0
        %519 = vmatpush2.bf16.msra.mxu0 0
        %520 = vmatprep.subr.bf16.mxu0 0
        %521 = vmatpush2.bf16.msra.mxu0 0
        %522 = vmatprep.mubr.bf16.mxu0 0
        %523 = vmatmul.mubr.bf16.gmra.mxu0 %v488
        %v524 = vpop.f32.mrf.mxu0
        %v525 = vadd.f32 0.0, %v524
        %v526 = vpop.f32.mrf.mxu0
        %v527 = vpop.f32.mrf.mxu0
        %v528 = vpop.f32.mrf.mxu0
        %529 = vdwg.mxu0
        %v530 = vmul.f32 %v525, 0.5
        %v531 = vmul.f32 %v525, 0.70710677
        %vm532 = vcmp.lt.f32.partialorder %v531, 0.0
        %v533 = vsel %vm532, -1.0, 1.0
        %v534 = vand.u32 2147483647, %v531
        %v535 = vmul.f32 %v534, 0.3275911
        %v536 = vadd.f32 %v535, 1.0
        %v537 = vrcp.pop %v536
        %v538 = vmul.f32 1.0, %v537
        %v539 = vmul.f32 %v538, 1.0614054
        %v540 = vadd.f32 %v539, -1.4531521
        %v541 = vmul.f32 %v538, %v540
        %v542 = vadd.f32 %v541, 1.4214138
        %v543 = vmul.f32 %v538, %v542
        %v544 = vadd.f32 %v543, -0.28449672
        %v545 = vmul.f32 %v538, %v544
        %v546 = vadd.f32 %v545, 0.2548296
        %v547 = vmul.f32 %v538, %v546
        %v548 = vsub.f32 0.0, %v534
        %v549 = vmul.f32 %v548, %v534
        %v550 = vmul.f32 %v549, 1.442695
        %v551 = vpow.pop %v550
        %v552 = vmul.f32 %v547, %v551
        %v553 = vsub.f32 1.0, %v552
        %v554 = vmul.f32 %v533, %v553
        %v555 = vadd.f32 %v554, 1.0
        %v556 = vmul.f32 %v530, %v555
        %v557 = vmul.f32 %v556, %v556
        %v558 = vsel %vm441, %v557, 0.0
        %559 = vadd.xlane.f32.xlu0 %v558
        %v560 = vpop.xlane.xlu0 %559
        %v561 = vadd.f32 %v560, 1e-12
        %v562 = vrsqrt.pop %v561
        %v563 = vpack.c.bf16 %v556, %v556
        %v564 = vld [vmem:[%s4] sm:$0xf]
        %v565 = vld [vmem:[%s4 + $0x4] sm:$0xf]
        %v566 = vld [vmem:[%s4 + $0x8] sm:$0xf]
        %v567 = vld [vmem:[%s4 + $0xc] sm:$0xf]
        %v572 = vunpack.c.l.b16 %v564
        %v573 = vunpack.c.l.b16 %v565
        %v574 = vunpack.c.l.b16 %v566
        %v575 = vunpack.c.l.b16 %v567
        %v576 = vpack.c.b16 %v573, %v572
        %v577 = vpack.c.b16 %v575, %v574
        %v581 = vsel %vm441, %v563, 0
        %583 = vmatprep.subr.bf16.mxu0 0
        %584 = vmatpush1.bf16.msra.mxu0 0
        %585 = vmatprep.subr.bf16.mxu0 0
        %586 = vmatpush1.bf16.msra.mxu0 0
        %587 = vmatprep.subr.bf16.mxu0 0
        %588 = vmatpush1.bf16.msra.mxu0 0
        %589 = vmatprep.subr.bf16.mxu0 0
        %590 = vmatpush1.bf16.msra.mxu0 0
        %591 = vmatprep.subr.bf16.mxu0 0
        %592 = vmatpush1.bf16.msra.mxu0 0
        %593 = vmatprep.subr.bf16.mxu0 0
        %594 = vmatpush1.bf16.msra.mxu0 0
        %595 = vmatprep.subr.bf16.mxu0 0
        %596 = vmatpush1.bf16.msra.mxu0 %v577
        %597 = vmatprep.subr.bf16.mxu0 0
        %598 = vmatpush1.bf16.msra.mxu0 %v576
        %599 = vmatprep.subr.bf16.mxu0 0
        %600 = vmatpush2.bf16.msra.mxu0 0
        %601 = vmatprep.subr.bf16.mxu0 0
        %602 = vmatpush2.bf16.msra.mxu0 0
        %603 = vmatprep.subr.bf16.mxu0 0
        %604 = vmatpush2.bf16.msra.mxu0 0
        %605 = vmatprep.subr.bf16.mxu0 0
        %606 = vmatpush2.bf16.msra.mxu0 0
        %607 = vmatprep.subr.bf16.mxu0 0
        %608 = vmatpush2.bf16.msra.mxu0 0
        %609 = vmatprep.subr.bf16.mxu0 0
        %610 = vmatpush2.bf16.msra.mxu0 0
        %611 = vmatprep.subr.bf16.mxu0 0
        %612 = vmatpush2.bf16.msra.mxu0 0
        %613 = vmatprep.subr.bf16.mxu0 0
        %614 = vmatpush2.bf16.msra.mxu0 0
        %615 = vmatprep.mubr.bf16.mxu0 0
        %616 = vmatmul.mubr.bf16.gmra.mxu0 %v581
        %v617 = vpop.f32.mrf.mxu0
        %v618 = vadd.f32 0.0, %v617
        %v619 = vpop.f32.mrf.mxu0
        %v620 = vpop.f32.mrf.mxu0
        %v621 = vpop.f32.mrf.mxu0
        %622 = vdwg.mxu0
        %v623 = vmul.f32 %v562, 5.656854
        %v624 = vmul.f32 %v618, %v623
        %626 = vrot.lane.b32.xlu0 %v557, 96
        %v627 = vpop.permute.xlu0 %626
        %v629 = vsel %vm441, %v627, 0.0
        %630 = vadd.xlane.f32.xlu0 %v629
        %v631 = vpop.xlane.xlu0 %630
        %v632 = vadd.f32 %v631, 1e-12
        %v633 = vrsqrt.pop %v632
        %v634 = vld [vmem:[%s5] sm:$0xf]
        %v635 = vld [vmem:[%s5 + $0x4] sm:$0xf]
        %v636 = vld [vmem:[%s5 + $0x8] sm:$0xf]
        %v637 = vld [vmem:[%s5 + $0xc] sm:$0xf]
        %639 = vrot.lane.b32.xlu0 %v563, 96
        %v640 = vpop.permute.xlu0 %639
        %v645 = vunpack.c.l.b16 %v634
        %v646 = vunpack.c.l.b16 %v635
        %v647 = vunpack.c.l.b16 %v636
        %v648 = vunpack.c.l.b16 %v637
        %v649 = vpack.c.b16 %v646, %v645
        %v650 = vpack.c.b16 %v648, %v647
        %v654 = vsel %vm441, %v640, 0
        %656 = vmatprep.subr.bf16.mxu0 0
        %657 = vmatpush1.bf16.msra.mxu0 0
        %658 = vmatprep.subr.bf16.mxu0 0
        %659 = vmatpush1.bf16.msra.mxu0 0
        %660 = vmatprep.subr.bf16.mxu0 0
        %661 = vmatpush1.bf16.msra.mxu0 0
        %662 = vmatprep.subr.bf16.mxu0 0
        %663 = vmatpush1.bf16.msra.mxu0 0
        %664 = vmatprep.subr.bf16.mxu0 0
        %665 = vmatpush1.bf16.msra.mxu0 0
        %666 = vmatprep.subr.bf16.mxu0 0
        %667 = vmatpush1.bf16.msra.mxu0 0
        %668 = vmatprep.subr.bf16.mxu0 0
        %669 = vmatpush1.bf16.msra.mxu0 %v650
        %670 = vmatprep.subr.bf16.mxu0 0
        %671 = vmatpush1.bf16.msra.mxu0 %v649
        %672 = vmatprep.subr.bf16.mxu0 0
        %673 = vmatpush2.bf16.msra.mxu0 0
        %674 = vmatprep.subr.bf16.mxu0 0
        %675 = vmatpush2.bf16.msra.mxu0 0
        %676 = vmatprep.subr.bf16.mxu0 0
        %677 = vmatpush2.bf16.msra.mxu0 0
        %678 = vmatprep.subr.bf16.mxu0 0
        %679 = vmatpush2.bf16.msra.mxu0 0
        %680 = vmatprep.subr.bf16.mxu0 0
        %681 = vmatpush2.bf16.msra.mxu0 0
        %682 = vmatprep.subr.bf16.mxu0 0
        %683 = vmatpush2.bf16.msra.mxu0 0
        %684 = vmatprep.subr.bf16.mxu0 0
        %685 = vmatpush2.bf16.msra.mxu0 0
        %686 = vmatprep.subr.bf16.mxu0 0
        %687 = vmatpush2.bf16.msra.mxu0 0
        %688 = vmatprep.mubr.bf16.mxu0 0
        %689 = vmatmul.mubr.bf16.gmra.mxu0 %v654
        %v690 = vpop.f32.mrf.mxu0
        %v691 = vadd.f32 0.0, %v690
        %v692 = vpop.f32.mrf.mxu0
        %v693 = vpop.f32.mrf.mxu0
        %v694 = vpop.f32.mrf.mxu0
        %695 = vdwg.mxu0
        %v696 = vmul.f32 %v633, 5.656854
        %v697 = vmul.f32 %v691, %v696
        %698 = vrot.lane.b32.xlu0 %v557, 64
        %v699 = vpop.permute.xlu0 %698
        %v701 = vsel %vm441, %v699, 0.0
        %702 = vadd.xlane.f32.xlu0 %v701
        %v703 = vpop.xlane.xlu0 %702
        %v704 = vadd.f32 %v703, 1e-12
        %v705 = vrsqrt.pop %v704
        %v706 = vld [vmem:[%s6] sm:$0xf]
        %v707 = vld [vmem:[%s6 + $0x4] sm:$0xf]
        %v708 = vld [vmem:[%s6 + $0x8] sm:$0xf]
        %v709 = vld [vmem:[%s6 + $0xc] sm:$0xf]
        %710 = vrot.lane.b32.xlu0 %v563, 64
        %v711 = vpop.permute.xlu0 %710
        %v716 = vunpack.c.l.b16 %v706
        %v717 = vunpack.c.l.b16 %v707
        %v718 = vunpack.c.l.b16 %v708
        %v719 = vunpack.c.l.b16 %v709
        %v720 = vpack.c.b16 %v717, %v716
        %v721 = vpack.c.b16 %v719, %v718
        %v725 = vsel %vm441, %v711, 0
        %727 = vmatprep.subr.bf16.mxu0 0
        %728 = vmatpush1.bf16.msra.mxu0 0
        %729 = vmatprep.subr.bf16.mxu0 0
        %730 = vmatpush1.bf16.msra.mxu0 0
        %731 = vmatprep.subr.bf16.mxu0 0
        %732 = vmatpush1.bf16.msra.mxu0 0
        %733 = vmatprep.subr.bf16.mxu0 0
        %734 = vmatpush1.bf16.msra.mxu0 0
        %735 = vmatprep.subr.bf16.mxu0 0
        %736 = vmatpush1.bf16.msra.mxu0 0
        %737 = vmatprep.subr.bf16.mxu0 0
        %738 = vmatpush1.bf16.msra.mxu0 0
        %739 = vmatprep.subr.bf16.mxu0 0
        %740 = vmatpush1.bf16.msra.mxu0 %v721
        %741 = vmatprep.subr.bf16.mxu0 0
        %742 = vmatpush1.bf16.msra.mxu0 %v720
        %743 = vmatprep.subr.bf16.mxu0 0
        %744 = vmatpush2.bf16.msra.mxu0 0
        %745 = vmatprep.subr.bf16.mxu0 0
        %746 = vmatpush2.bf16.msra.mxu0 0
        %747 = vmatprep.subr.bf16.mxu0 0
        %748 = vmatpush2.bf16.msra.mxu0 0
        %749 = vmatprep.subr.bf16.mxu0 0
        %750 = vmatpush2.bf16.msra.mxu0 0
        %751 = vmatprep.subr.bf16.mxu0 0
        %752 = vmatpush2.bf16.msra.mxu0 0
        %753 = vmatprep.subr.bf16.mxu0 0
        %754 = vmatpush2.bf16.msra.mxu0 0
        %755 = vmatprep.subr.bf16.mxu0 0
        %756 = vmatpush2.bf16.msra.mxu0 0
        %757 = vmatprep.subr.bf16.mxu0 0
        %758 = vmatpush2.bf16.msra.mxu0 0
        %759 = vmatprep.mubr.bf16.mxu0 0
        %760 = vmatmul.mubr.bf16.gmra.mxu0 %v725
        %v761 = vpop.f32.mrf.mxu0
        %v762 = vadd.f32 0.0, %v761
        %v763 = vpop.f32.mrf.mxu0
        %v764 = vpop.f32.mrf.mxu0
        %v765 = vpop.f32.mrf.mxu0
        %766 = vdwg.mxu0
        %v767 = vmul.f32 %v705, 5.656854
        %v768 = vmul.f32 %v762, %v767
        %v769 = vpack.c.bf16 %v624, %v624
        %v770 = vpack.c.bf16 %v697, %v697
        %v771 = vpack.c.bf16 %v768, %v768
        %vm772 = vcmask 64512
        %v774 = vsel %vm772, %v769, 0
        %v777 = vsel %vm772, %v770, 0
        %779 = vmatprep.subr.bf16.mxu0 0
        %780 = vmatpush1.bf16.xpose.msra.mxu0 0
        %781 = vmatprep.subr.bf16.mxu0 0
        %782 = vmatpush1.bf16.xpose.msra.mxu0 0
        %783 = vmatprep.subr.bf16.mxu0 0
        %784 = vmatpush1.bf16.xpose.msra.mxu0 0
        %785 = vmatprep.subr.bf16.mxu0 0
        %786 = vmatpush1.bf16.xpose.msra.mxu0 0
        %787 = vmatprep.subr.bf16.mxu0 0
        %788 = vmatpush1.bf16.xpose.msra.mxu0 0
        %789 = vmatprep.subr.bf16.mxu0 0
        %790 = vmatpush1.bf16.xpose.msra.mxu0 0
        %791 = vmatprep.subr.bf16.mxu0 0
        %792 = vmatpush1.bf16.xpose.msra.mxu0 0
        %793 = vmatprep.subr.bf16.mxu0 0
        %794 = vmatpush1.bf16.xpose.msra.mxu0 %v777
        %795 = vmatprep.subr.bf16.mxu0 0
        %796 = vmatpush2.bf16.xpose.msra.mxu0 0
        %797 = vmatprep.subr.bf16.mxu0 0
        %798 = vmatpush2.bf16.xpose.msra.mxu0 0
        %799 = vmatprep.subr.bf16.mxu0 0
        %800 = vmatpush2.bf16.xpose.msra.mxu0 0
        %801 = vmatprep.subr.bf16.mxu0 0
        %802 = vmatpush2.bf16.xpose.msra.mxu0 0
        %803 = vmatprep.subr.bf16.mxu0 0
        %804 = vmatpush2.bf16.xpose.msra.mxu0 0
        %805 = vmatprep.subr.bf16.mxu0 0
        %806 = vmatpush2.bf16.xpose.msra.mxu0 0
        %807 = vmatprep.subr.bf16.mxu0 0
        %808 = vmatpush2.bf16.xpose.msra.mxu0 0
        %809 = vmatprep.subr.bf16.mxu0 0
        %810 = vmatpush2.bf16.xpose.msra.mxu0 0
        %811 = vmatprep.mubr.bf16.mxu0 0
        %812 = vmatmul.mubr.bf16.gmra.mxu0 %v774
        %v813 = vpop.f32.mrf.mxu0
        %v814 = vadd.f32 0.0, %v813
        %v815 = vpop.f32.mrf.mxu0
        %v816 = vpop.f32.mrf.mxu0
        %v817 = vpop.f32.mrf.mxu0
        %818 = vdwg.mxu0
        %v819 = vmul.f32 %v814, 0.35355338
        %v820 = vsel %vm772, %v819, -inf
        %821 = vmax.xlane.f32.xlu0 %v820
        %v822 = vpop.xlane.xlu0 %821
        %v823 = vsub.f32 %v819, %v822
        %v824 = vmul.f32 %v823, 1.442695
        %v825 = vpow.pop %v824
        %v826 = vsel %vm772, %v825, 0.0
        %827 = vadd.xlane.f32.xlu0 %v826
        %v828 = vpop.xlane.xlu0 %827
        %v829 = vrcp.pop %v828
        %v830 = vmul.f32 %v825, %v829
        %v831 = vpack.c.bf16 %v830, %v830
        %v833 = vsel %vm772, %v831, 0
        %vm835 = vcmask 1043456
        %v837 = vsel %vm835, %v771, 0
        %839 = vmatprep.subr.bf16.mxu0 0
        %840 = vmatpush1.bf16.msra.mxu0 0
        %841 = vmatprep.subr.bf16.mxu0 0
        %842 = vmatpush1.bf16.msra.mxu0 0
        %843 = vmatprep.subr.bf16.mxu0 0
        %844 = vmatpush1.bf16.msra.mxu0 0
        %845 = vmatprep.subr.bf16.mxu0 0
        %846 = vmatpush1.bf16.msra.mxu0 0
        %847 = vmatprep.subr.bf16.mxu0 0
        %848 = vmatpush1.bf16.msra.mxu0 0
        %849 = vmatprep.subr.bf16.mxu0 0
        %850 = vmatpush1.bf16.msra.mxu0 0
        %851 = vmatprep.subr.bf16.mxu0 0
        %852 = vmatpush1.bf16.msra.mxu0 0
        %853 = vmatprep.subr.bf16.mxu0 0
        %854 = vmatpush1.bf16.msra.mxu0 %v837
        %855 = vmatprep.subr.bf16.mxu0 0
        %856 = vmatpush2.bf16.msra.mxu0 0
        %857 = vmatprep.subr.bf16.mxu0 0
        %858 = vmatpush2.bf16.msra.mxu0 0
        %859 = vmatprep.subr.bf16.mxu0 0
        %860 = vmatpush2.bf16.msra.mxu0 0
        %861 = vmatprep.subr.bf16.mxu0 0
        %862 = vmatpush2.bf16.msra.mxu0 0
        %863 = vmatprep.subr.bf16.mxu0 0
        %864 = vmatpush2.bf16.msra.mxu0 0
        %865 = vmatprep.subr.bf16.mxu0 0
        %866 = vmatpush2.bf16.msra.mxu0 0
        %867 = vmatprep.subr.bf16.mxu0 0
        %868 = vmatpush2.bf16.msra.mxu0 0
        %869 = vmatprep.subr.bf16.mxu0 0
        %870 = vmatpush2.bf16.msra.mxu0 0
        %871 = vmatprep.mubr.bf16.mxu0 0
        %872 = vmatmul.mubr.bf16.gmra.mxu0 %v833
        %v873 = vpop.f32.mrf.mxu0
        %v874 = vadd.f32 0.0, %v873
        %v875 = vpop.f32.mrf.mxu0
        %v876 = vpop.f32.mrf.mxu0
        %v877 = vpop.f32.mrf.mxu0
        %878 = vdwg.mxu0
        %v879 = vpack.c.bf16 %v874, %v874
        %vm880 = vcmask 60416
        %881 = vst.msk [vmem:[#allocation2] sm:$0xf] %vm880, %v879
        %883 = vrot.lane.b32.xlu0 %v769, 120
        %v884 = vpop.permute.xlu0 %883
        %886 = vrot.lane.b32.xlu0 %v770, 120
        %v887 = vpop.permute.xlu0 %886
        %v889 = vsel %vm772, %v884, 0
        %v892 = vsel %vm772, %v887, 0
        %894 = vmatprep.subr.bf16.mxu0 0
        %895 = vmatpush1.bf16.xpose.msra.mxu0 0
        %896 = vmatprep.subr.bf16.mxu0 0
        %897 = vmatpush1.bf16.xpose.msra.mxu0 0
        %898 = vmatprep.subr.bf16.mxu0 0
        %899 = vmatpush1.bf16.xpose.msra.mxu0 0
        %900 = vmatprep.subr.bf16.mxu0 0
        %901 = vmatpush1.bf16.xpose.msra.mxu0 0
        %902 = vmatprep.subr.bf16.mxu0 0
        %903 = vmatpush1.bf16.xpose.msra.mxu0 0
        %904 = vmatprep.subr.bf16.mxu0 0
        %905 = vmatpush1.bf16.xpose.msra.mxu0 0
        %906 = vmatprep.subr.bf16.mxu0 0
        %907 = vmatpush1.bf16.xpose.msra.mxu0 0
        %908 = vmatprep.subr.bf16.mxu0 0
        %909 = vmatpush1.bf16.xpose.msra.mxu0 %v892
        %910 = vmatprep.subr.bf16.mxu0 0
        %911 = vmatpush2.bf16.xpose.msra.mxu0 0
        %912 = vmatprep.subr.bf16.mxu0 0
        %913 = vmatpush2.bf16.xpose.msra.mxu0 0
        %914 = vmatprep.subr.bf16.mxu0 0
        %915 = vmatpush2.bf16.xpose.msra.mxu0 0
        %916 = vmatprep.subr.bf16.mxu0 0
        %917 = vmatpush2.bf16.xpose.msra.mxu0 0
        %918 = vmatprep.subr.bf16.mxu0 0
        %919 = vmatpush2.bf16.xpose.msra.mxu0 0
        %920 = vmatprep.subr.bf16.mxu0 0
        %921 = vmatpush2.bf16.xpose.msra.mxu0 0
        %922 = vmatprep.subr.bf16.mxu0 0
        %923 = vmatpush2.bf16.xpose.msra.mxu0 0
        %924 = vmatprep.subr.bf16.mxu0 0
        %925 = vmatpush2.bf16.xpose.msra.mxu0 0
        %926 = vmatprep.mubr.bf16.mxu0 0
        %927 = vmatmul.mubr.bf16.gmra.mxu0 %v889
        %v928 = vpop.f32.mrf.mxu0
        %v929 = vadd.f32 0.0, %v928
        %v930 = vpop.f32.mrf.mxu0
        %v931 = vpop.f32.mrf.mxu0
        %v932 = vpop.f32.mrf.mxu0
        %933 = vdwg.mxu0
        %v934 = vmul.f32 %v929, 0.35355338
        %v935 = vsel %vm772, %v934, -inf
        %936 = vmax.xlane.f32.xlu0 %v935
        %v937 = vpop.xlane.xlu0 %936
        %v938 = vsub.f32 %v934, %v937
        %v939 = vmul.f32 %v938, 1.442695
        %v940 = vpow.pop %v939
        %v941 = vsel %vm772, %v940, 0.0
        %942 = vadd.xlane.f32.xlu0 %v941
        %v943 = vpop.xlane.xlu0 %942
        %v944 = vrcp.pop %v943
        %v945 = vmul.f32 %v940, %v944
        %v946 = vpack.c.bf16 %v945, %v945
        %948 = vrot.lane.b32.xlu0 %v771, 120
        %v949 = vpop.permute.xlu0 %948
        %v951 = vsel %vm772, %v946, 0
        %v954 = vsel %vm835, %v949, 0
        %956 = vmatprep.subr.bf16.mxu0 0
        %957 = vmatpush1.bf16.msra.mxu0 0
        %958 = vmatprep.subr.bf16.mxu0 0
        %959 = vmatpush1.bf16.msra.mxu0 0
        %960 = vmatprep.subr.bf16.mxu0 0
        %961 = vmatpush1.bf16.msra.mxu0 0
        %962 = vmatprep.subr.bf16.mxu0 0
        %963 = vmatpush1.bf16.msra.mxu0 0
        %964 = vmatprep.subr.bf16.mxu0 0
        %965 = vmatpush1.bf16.msra.mxu0 0
        %966 = vmatprep.subr.bf16.mxu0 0
        %967 = vmatpush1.bf16.msra.mxu0 0
        %968 = vmatprep.subr.bf16.mxu0 0
        %969 = vmatpush1.bf16.msra.mxu0 0
        %970 = vmatprep.subr.bf16.mxu0 0
        %971 = vmatpush1.bf16.msra.mxu0 %v954
        %972 = vmatprep.subr.bf16.mxu0 0
        %973 = vmatpush2.bf16.msra.mxu0 0
        %974 = vmatprep.subr.bf16.mxu0 0
        %975 = vmatpush2.bf16.msra.mxu0 0
        %976 = vmatprep.subr.bf16.mxu0 0
        %977 = vmatpush2.bf16.msra.mxu0 0
        %978 = vmatprep.subr.bf16.mxu0 0
        %979 = vmatpush2.bf16.msra.mxu0 0
        %980 = vmatprep.subr.bf16.mxu0 0
        %981 = vmatpush2.bf16.msra.mxu0 0
        %982 = vmatprep.subr.bf16.mxu0 0
        %983 = vmatpush2.bf16.msra.mxu0 0
        %984 = vmatprep.subr.bf16.mxu0 0
        %985 = vmatpush2.bf16.msra.mxu0 0
        %986 = vmatprep.subr.bf16.mxu0 0
        %987 = vmatpush2.bf16.msra.mxu0 0
        %988 = vmatprep.mubr.bf16.mxu0 0
        %989 = vmatmul.mubr.bf16.gmra.mxu0 %v951
        %v990 = vpop.f32.mrf.mxu0
        %v991 = vadd.f32 0.0, %v990
        %v992 = vpop.f32.mrf.mxu0
        %v993 = vpop.f32.mrf.mxu0
        %v994 = vpop.f32.mrf.mxu0
        %995 = vdwg.mxu0
        %v996 = vpack.c.bf16 %v991, %v991
        %v998 = vunpack.c.l.b16 %v996
        %v999 = vpack.c.b16 %v998, %v998
        %1000 = vrot.lane.b32.xlu0 %v999, 8
        %v1001 = vpop.permute.xlu0 %1000
        %vm1003 = vcmask 126016
        %1004 = vst.msk [vmem:[#allocation2] sm:$0xf] %vm1003, %v1001
        %1005 = vrot.lane.b32.xlu0 %v769, 112
        %v1006 = vpop.permute.xlu0 %1005
        %1007 = vrot.lane.b32.xlu0 %v770, 112
        %v1008 = vpop.permute.xlu0 %1007
        %v1010 = vsel %vm772, %v1006, 0
        %v1013 = vsel %vm772, %v1008, 0
        %1015 = vmatprep.subr.bf16.mxu0 0
        %1016 = vmatpush1.bf16.xpose.msra.mxu0 0
        %1017 = vmatprep.subr.bf16.mxu0 0
        %1018 = vmatpush1.bf16.xpose.msra.mxu0 0
        %1019 = vmatprep.subr.bf16.mxu0 0
        %1020 = vmatpush1.bf16.xpose.msra.mxu0 0
        %1021 = vmatprep.subr.bf16.mxu0 0
        %1022 = vmatpush1.bf16.xpose.msra.mxu0 0
        %1023 = vmatprep.subr.bf16.mxu0 0
        %1024 = vmatpush1.bf16.xpose.msra.mxu0 0
        %1025 = vmatprep.subr.bf16.mxu0 0
        %1026 = vmatpush1.bf16.xpose.msra.mxu0 0
        %1027 = vmatprep.subr.bf16.mxu0 0
        %1028 = vmatpush1.bf16.xpose.msra.mxu0 0
        %1029 = vmatprep.subr.bf16.mxu0 0
        %1030 = vmatpush1.bf16.xpose.msra.mxu0 %v1013
        %1031 = vmatprep.subr.bf16.mxu0 0
        %1032 = vmatpush2.bf16.xpose.msra.mxu0 0
        %1033 = vmatprep.subr.bf16.mxu0 0
        %1034 = vmatpush2.bf16.xpose.msra.mxu0 0
        %1035 = vmatprep.subr.bf16.mxu0 0
        %1036 = vmatpush2.bf16.xpose.msra.mxu0 0
        %1037 = vmatprep.subr.bf16.mxu0 0
        %1038 = vmatpush2.bf16.xpose.msra.mxu0 0
        %1039 = vmatprep.subr.bf16.mxu0 0
        %1040 = vmatpush2.bf16.xpose.msra.mxu0 0
        %1041 = vmatprep.subr.bf16.mxu0 0
        %1042 = vmatpush2.bf16.xpose.msra.mxu0 0
        %1043 = vmatprep.subr.bf16.mxu0 0
        %1044 = vmatpush2.bf16.xpose.msra.mxu0 0
        %1045 = vmatprep.subr.bf16.mxu0 0
        %1046 = vmatpush2.bf16.xpose.msra.mxu0 0
        %1047 = vmatprep.mubr.bf16.mxu0 0
        %1048 = vmatmul.mubr.bf16.gmra.mxu0 %v1010
        %v1049 = vpop.f32.mrf.mxu0
        %v1050 = vadd.f32 0.0, %v1049
        %v1051 = vpop.f32.mrf.mxu0
        %v1052 = vpop.f32.mrf.mxu0
        %v1053 = vpop.f32.mrf.mxu0
        %1054 = vdwg.mxu0
        %v1055 = vmul.f32 %v1050, 0.35355338
        %v1056 = vsel %vm772, %v1055, -inf
        %1057 = vmax.xlane.f32.xlu0 %v1056
        %v1058 = vpop.xlane.xlu0 %1057
        %v1059 = vsub.f32 %v1055, %v1058
        %v1060 = vmul.f32 %v1059, 1.442695
        %v1061 = vpow.pop %v1060
        %v1062 = vsel %vm772, %v1061, 0.0
        %1063 = vadd.xlane.f32.xlu0 %v1062
        %v1064 = vpop.xlane.xlu0 %1063
        %v1065 = vrcp.pop %v1064
        %v1066 = vmul.f32 %v1061, %v1065
        %v1067 = vpack.c.bf16 %v1066, %v1066
        %1068 = vrot.lane.b32.xlu0 %v771, 112
        %v1069 = vpop.permute.xlu0 %1068
        %v1071 = vsel %vm772, %v1067, 0
        %v1074 = vsel %vm835, %v1069, 0
        %1076 = vmatprep.subr.bf16.mxu0 0
        %1077 = vmatpush1.bf16.msra.mxu0 0
        %1078 = vmatprep.subr.bf16.mxu0 0
        %1079 = vmatpush1.bf16.msra.mxu0 0
        %1080 = vmatprep.subr.bf16.mxu0 0
        %1081 = vmatpush1.bf16.msra.mxu0 0
        %1082 = vmatprep.subr.bf16.mxu0 0
        %1083 = vmatpush1.bf16.msra.mxu0 0
        %1084 = vmatprep.subr.bf16.mxu0 0
        %1085 = vmatpush1.bf16.msra.mxu0 0
        %1086 = vmatprep.subr.bf16.mxu0 0
        %1087 = vmatpush1.bf16.msra.mxu0 0
        %1088 = vmatprep.subr.bf16.mxu0 0
        %1089 = vmatpush1.bf16.msra.mxu0 0
        %1090 = vmatprep.subr.bf16.mxu0 0
        %1091 = vmatpush1.bf16.msra.mxu0 %v1074
        %1092 = vmatprep.subr.bf16.mxu0 0
        %1093 = vmatpush2.bf16.msra.mxu0 0
        %1094 = vmatprep.subr.bf16.mxu0 0
        %1095 = vmatpush2.bf16.msra.mxu0 0
        %1096 = vmatprep.subr.bf16.mxu0 0
        %1097 = vmatpush2.bf16.msra.mxu0 0
        %1098 = vmatprep.subr.bf16.mxu0 0
        %1099 = vmatpush2.bf16.msra.mxu0 0
        %1100 = vmatprep.subr.bf16.mxu0 0
        %1101 = vmatpush2.bf16.msra.mxu0 0
        %1102 = vmatprep.subr.bf16.mxu0 0
        %1103 = vmatpush2.bf16.msra.mxu0 0
        %1104 = vmatprep.subr.bf16.mxu0 0
        %1105 = vmatpush2.bf16.msra.mxu0 0
        %1106 = vmatprep.subr.bf16.mxu0 0
        %1107 = vmatpush2.bf16.msra.mxu0 0
        %1108 = vmatprep.mubr.bf16.mxu0 0
        %1109 = vmatmul.mubr.bf16.gmra.mxu0 %v1071
        %v1110 = vpop.f32.mrf.mxu0
        %v1111 = vadd.f32 0.0, %v1110
        %v1112 = vpop.f32.mrf.mxu0
        %v1113 = vpop.f32.mrf.mxu0
        %v1114 = vpop.f32.mrf.mxu0
        %1115 = vdwg.mxu0
        %v1116 = vpack.c.bf16 %v1111, %v1111
        %v1118 = vunpack.c.l.b16 %v1116
        %v1119 = vpack.c.b16 %v1118, %v1118
        %1120 = vrot.lane.b32.xlu0 %v1119, 16
        %v1121 = vpop.permute.xlu0 %1120
        %vm1123 = vcmask 191616
        %1124 = vst.msk [vmem:[#allocation2] sm:$0xf] %vm1123, %v1121
        %1125 = vrot.lane.b32.xlu0 %v769, 104
        %v1126 = vpop.permute.xlu0 %1125
        %1127 = vrot.lane.b32.xlu0 %v770, 104
        %v1128 = vpop.permute.xlu0 %1127
        %v1130 = vsel %vm772, %v1126, 0
        %v1133 = vsel %vm772, %v1128, 0
        %1135 = vmatprep.subr.bf16.mxu0 0
        %1136 = vmatpush1.bf16.xpose.msra.mxu0 0
        %1137 = vmatprep.subr.bf16.mxu0 0
        %1138 = vmatpush1.bf16.xpose.msra.mxu0 0
        %1139 = vmatprep.subr.bf16.mxu0 0
        %1140 = vmatpush1.bf16.xpose.msra.mxu0 0
        %1141 = vmatprep.subr.bf16.mxu0 0
        %1142 = vmatpush1.bf16.xpose.msra.mxu0 0
        %1143 = vmatprep.subr.bf16.mxu0 0
        %1144 = vmatpush1.bf16.xpose.msra.mxu0 0
        %1145 = vmatprep.subr.bf16.mxu0 0
        %1146 = vmatpush1.bf16.xpose.msra.mxu0 0
        %1147 = vmatprep.subr.bf16.mxu0 0
        %1148 = vmatpush1.bf16.xpose.msra.mxu0 0
        %1149 = vmatprep.subr.bf16.mxu0 0
        %1150 = vmatpush1.bf16.xpose.msra.mxu0 %v1133
        %1151 = vmatprep.subr.bf16.mxu0 0
        %1152 = vmatpush2.bf16.xpose.msra.mxu0 0
        %1153 = vmatprep.subr.bf16.mxu0 0
        %1154 = vmatpush2.bf16.xpose.msra.mxu0 0
        %1155 = vmatprep.subr.bf16.mxu0 0
        %1156 = vmatpush2.bf16.xpose.msra.mxu0 0
        %1157 = vmatprep.subr.bf16.mxu0 0
        %1158 = vmatpush2.bf16.xpose.msra.mxu0 0
        %1159 = vmatprep.subr.bf16.mxu0 0
        %1160 = vmatpush2.bf16.xpose.msra.mxu0 0
        %1161 = vmatprep.subr.bf16.mxu0 0
        %1162 = vmatpush2.bf16.xpose.msra.mxu0 0
        %1163 = vmatprep.subr.bf16.mxu0 0
        %1164 = vmatpush2.bf16.xpose.msra.mxu0 0
        %1165 = vmatprep.subr.bf16.mxu0 0
        %1166 = vmatpush2.bf16.xpose.msra.mxu0 0
        %1167 = vmatprep.mubr.bf16.mxu0 0
        %1168 = vmatmul.mubr.bf16.gmra.mxu0 %v1130
        %v1169 = vpop.f32.mrf.mxu0
        %v1170 = vadd.f32 0.0, %v1169
        %v1171 = vpop.f32.mrf.mxu0
        %v1172 = vpop.f32.mrf.mxu0
        %v1173 = vpop.f32.mrf.mxu0
        %1174 = vdwg.mxu0
        %v1175 = vmul.f32 %v1170, 0.35355338
        %v1176 = vsel %vm772, %v1175, -inf
        %1177 = vmax.xlane.f32.xlu0 %v1176
        %v1178 = vpop.xlane.xlu0 %1177
        %v1179 = vsub.f32 %v1175, %v1178
        %v1180 = vmul.f32 %v1179, 1.442695
        %v1181 = vpow.pop %v1180
        %v1182 = vsel %vm772, %v1181, 0.0
        %1183 = vadd.xlane.f32.xlu0 %v1182
        %v1184 = vpop.xlane.xlu0 %1183
        %v1185 = vrcp.pop %v1184
        %v1186 = vmul.f32 %v1181, %v1185
        %v1187 = vpack.c.bf16 %v1186, %v1186
        %1188 = vrot.lane.b32.xlu0 %v771, 104
        %v1189 = vpop.permute.xlu0 %1188
        %v1191 = vsel %vm772, %v1187, 0
        %v1194 = vsel %vm835, %v1189, 0
        %1196 = vmatprep.subr.bf16.mxu0 0
        %1197 = vmatpush1.bf16.msra.mxu0 0
        %1198 = vmatprep.subr.bf16.mxu0 0
        %1199 = vmatpush1.bf16.msra.mxu0 0
        %1200 = vmatprep.subr.bf16.mxu0 0
        %1201 = vmatpush1.bf16.msra.mxu0 0
        %1202 = vmatprep.subr.bf16.mxu0 0
        %1203 = vmatpush1.bf16.msra.mxu0 0
        %1204 = vmatprep.subr.bf16.mxu0 0
        %1205 = vmatpush1.bf16.msra.mxu0 0
        %1206 = vmatprep.subr.bf16.mxu0 0
        %1207 = vmatpush1.bf16.msra.mxu0 0
        %1208 = vmatprep.subr.bf16.mxu0 0
        %1209 = vmatpush1.bf16.msra.mxu0 0
        %1210 = vmatprep.subr.bf16.mxu0 0
        %1211 = vmatpush1.bf16.msra.mxu0 %v1194
        %1212 = vmatprep.subr.bf16.mxu0 0
        %1213 = vmatpush2.bf16.msra.mxu0 0
        %1214 = vmatprep.subr.bf16.mxu0 0
        %1215 = vmatpush2.bf16.msra.mxu0 0
        %1216 = vmatprep.subr.bf16.mxu0 0
        %1217 = vmatpush2.bf16.msra.mxu0 0
        %1218 = vmatprep.subr.bf16.mxu0 0
        %1219 = vmatpush2.bf16.msra.mxu0 0
        %1220 = vmatprep.subr.bf16.mxu0 0
        %1221 = vmatpush2.bf16.msra.mxu0 0
        %1222 = vmatprep.subr.bf16.mxu0 0
        %1223 = vmatpush2.bf16.msra.mxu0 0
        %1224 = vmatprep.subr.bf16.mxu0 0
        %1225 = vmatpush2.bf16.msra.mxu0 0
        %1226 = vmatprep.subr.bf16.mxu0 0
        %1227 = vmatpush2.bf16.msra.mxu0 0
        %1228 = vmatprep.mubr.bf16.mxu0 0
        %1229 = vmatmul.mubr.bf16.gmra.mxu0 %v1191
        %v1230 = vpop.f32.mrf.mxu0
        %v1231 = vadd.f32 0.0, %v1230
        %v1232 = vpop.f32.mrf.mxu0
        %v1233 = vpop.f32.mrf.mxu0
        %v1234 = vpop.f32.mrf.mxu0
        %1235 = vdwg.mxu0
        %v1236 = vpack.c.bf16 %v1231, %v1231
        %v1238 = vunpack.c.l.b16 %v1236
        %v1239 = vpack.c.b16 %v1238, %v1238
        %1240 = vrot.lane.b32.xlu0 %v1239, 24
        %v1241 = vpop.permute.xlu0 %1240
        %vm1243 = vcmask 257216
        %1244 = vst.msk [vmem:[#allocation2] sm:$0xf] %vm1243, %v1241
        %v1245 = vld [vmem:[#allocation2] sm:$0xf]
        %v1246 = vld [vmem:[%s7] sm:$0xf]
        %v1247 = vld [vmem:[%s7 + $0x4] sm:$0xf]
        %v1248 = vld [vmem:[%s7 + $0x8] sm:$0xf]
        %v1249 = vld [vmem:[%s7 + $0xc] sm:$0xf]
        %v1250 = vld [vmem:[%s8] sm:$0xf]
        %v1251 = vld [vmem:[%s8 + $0x4] sm:$0xf]
        %v1252 = vld [vmem:[%s8 + $0x8] sm:$0xf]
        %v1253 = vld [vmem:[%s8 + $0xc] sm:$0xf]
        %v1258 = vunpack.c.l.b16 %v1246
        %v1259 = vunpack.c.l.b16 %v1247
        %v1260 = vunpack.c.l.b16 %v1248
        %v1261 = vunpack.c.l.b16 %v1249
        %v1262 = vpack.c.b16 %v1259, %v1258
        %v1263 = vpack.c.b16 %v1261, %v1260
        %v1267 = vsel %vm441, %v1245, 0
        %1269 = vmatprep.subr.bf16.mxu0 0
        %1270 = vmatpush1.bf16.msra.mxu0 0
        %1271 = vmatprep.subr.bf16.mxu0 0
        %1272 = vmatpush1.bf16.msra.mxu0 0
        %1273 = vmatprep.subr.bf16.mxu0 0
        %1274 = vmatpush1.bf16.msra.mxu0 0
        %1275 = vmatprep.subr.bf16.mxu0 0
        %1276 = vmatpush1.bf16.msra.mxu0 0
        %1277 = vmatprep.subr.bf16.mxu0 0
        %1278 = vmatpush1.bf16.msra.mxu0 0
        %1279 = vmatprep.subr.bf16.mxu0 0
        %1280 = vmatpush1.bf16.msra.mxu0 0
        %1281 = vmatprep.subr.bf16.mxu0 0
        %1282 = vmatpush1.bf16.msra.mxu0 %v1263
        %1283 = vmatprep.subr.bf16.mxu0 0
        %1284 = vmatpush1.bf16.msra.mxu0 %v1262
        %1285 = vmatprep.subr.bf16.mxu0 0
        %1286 = vmatpush2.bf16.msra.mxu0 0
        %1287 = vmatprep.subr.bf16.mxu0 0
        %1288 = vmatpush2.bf16.msra.mxu0 0
        %1289 = vmatprep.subr.bf16.mxu0 0
        %1290 = vmatpush2.bf16.msra.mxu0 0
        %1291 = vmatprep.subr.bf16.mxu0 0
        %1292 = vmatpush2.bf16.msra.mxu0 0
        %1293 = vmatprep.subr.bf16.mxu0 0
        %1294 = vmatpush2.bf16.msra.mxu0 0
        %1295 = vmatprep.subr.bf16.mxu0 0
        %1296 = vmatpush2.bf16.msra.mxu0 0
        %1297 = vmatprep.subr.bf16.mxu0 0
        %1298 = vmatpush2.bf16.msra.mxu0 0
        %1299 = vmatprep.subr.bf16.mxu0 0
        %1300 = vmatpush2.bf16.msra.mxu0 0
        %1301 = vmatprep.mubr.bf16.mxu0 0
        %1302 = vmatmul.mubr.bf16.gmra.mxu0 %v1267
        %v1303 = vpop.f32.mrf.mxu0
        %v1304 = vadd.f32 0.0, %v1303
        %v1305 = vpop.f32.mrf.mxu0
        %v1306 = vpop.f32.mrf.mxu0
        %v1307 = vpop.f32.mrf.mxu0
        %1308 = vdwg.mxu0
        %v1309 = vmul.f32 %v1304, 0.5
        %v1310 = vmul.f32 %v1304, 0.70710677
        %vm1311 = vcmp.lt.f32.partialorder %v1310, 0.0
        %v1312 = vsel %vm1311, -1.0, 1.0
        %v1313 = vand.u32 2147483647, %v1310
        %v1314 = vmul.f32 %v1313, 0.3275911
        %v1315 = vadd.f32 %v1314, 1.0
        %v1316 = vrcp.pop %v1315
        %v1317 = vmul.f32 1.0, %v1316
        %v1318 = vmul.f32 %v1317, 1.0614054
        %v1319 = vadd.f32 %v1318, -1.4531521
        %v1320 = vmul.f32 %v1317, %v1319
        %v1321 = vadd.f32 %v1320, 1.4214138
        %v1322 = vmul.f32 %v1317, %v1321
        %v1323 = vadd.f32 %v1322, -0.28449672
        %v1324 = vmul.f32 %v1317, %v1323
        %v1325 = vadd.f32 %v1324, 0.2548296
        %v1326 = vmul.f32 %v1317, %v1325
        %v1327 = vsub.f32 0.0, %v1313
        %v1328 = vmul.f32 %v1327, %v1313
        %v1329 = vmul.f32 %v1328, 1.442695
        %v1330 = vpow.pop %v1329
        %v1331 = vmul.f32 %v1326, %v1330
        %v1332 = vsub.f32 1.0, %v1331
        %v1333 = vmul.f32 %v1312, %v1332
        %v1334 = vadd.f32 %v1333, 1.0
        %v1335 = vmul.f32 %v1309, %v1334
        %v1336 = vmul.f32 %v1335, %v1335
        %v1337 = vsel %vm441, %v1336, 0.0
        %1338 = vadd.xlane.f32.xlu0 %v1337
        %v1339 = vpop.xlane.xlu0 %1338
        %v1340 = vadd.f32 %v1339, 1e-12
        %v1341 = vrsqrt.pop %v1340
        %v1342 = vpack.c.bf16 %v1335, %v1335
        %v1347 = vunpack.c.l.b16 %v1250
        %v1348 = vunpack.c.l.b16 %v1251
        %v1349 = vunpack.c.l.b16 %v1252
        %v1350 = vunpack.c.l.b16 %v1253
        %v1351 = vpack.c.b16 %v1348, %v1347
        %v1352 = vpack.c.b16 %v1350, %v1349
        %v1356 = vsel %vm441, %v1342, 0
        %1358 = vmatprep.subr.bf16.mxu0 0
        %1359 = vmatpush1.bf16.msra.mxu0 0
        %1360 = vmatprep.subr.bf16.mxu0 0
        %1361 = vmatpush1.bf16.msra.mxu0 0
        %1362 = vmatprep.subr.bf16.mxu0 0
        %1363 = vmatpush1.bf16.msra.mxu0 0
        %1364 = vmatprep.subr.bf16.mxu0 0
        %1365 = vmatpush1.bf16.msra.mxu0 0
        %1366 = vmatprep.subr.bf16.mxu0 0
        %1367 = vmatpush1.bf16.msra.mxu0 0
        %1368 = vmatprep.subr.bf16.mxu0 0
        %1369 = vmatpush1.bf16.msra.mxu0 0
        %1370 = vmatprep.subr.bf16.mxu0 0
        %1371 = vmatpush1.bf16.msra.mxu0 %v1352
        %1372 = vmatprep.subr.bf16.mxu0 0
        %1373 = vmatpush1.bf16.msra.mxu0 %v1351
        %1374 = vmatprep.subr.bf16.mxu0 0
        %1375 = vmatpush2.bf16.msra.mxu0 0
        %1376 = vmatprep.subr.bf16.mxu0 0
        %1377 = vmatpush2.bf16.msra.mxu0 0
        %1378 = vmatprep.subr.bf16.mxu0 0
        %1379 = vmatpush2.bf16.msra.mxu0 0
        %1380 = vmatprep.subr.bf16.mxu0 0
        %1381 = vmatpush2.bf16.msra.mxu0 0
        %1382 = vmatprep.subr.bf16.mxu0 0
        %1383 = vmatpush2.bf16.msra.mxu0 0
        %1384 = vmatprep.subr.bf16.mxu0 0
        %1385 = vmatpush2.bf16.msra.mxu0 0
        %1386 = vmatprep.subr.bf16.mxu0 0
        %1387 = vmatpush2.bf16.msra.mxu0 0
        %1388 = vmatprep.subr.bf16.mxu0 0
        %1389 = vmatpush2.bf16.msra.mxu0 0
        %1390 = vmatprep.mubr.bf16.mxu0 0
        %1391 = vmatmul.mubr.bf16.gmra.mxu0 %v1356
        %v1392 = vpop.f32.mrf.mxu0
        %v1393 = vadd.f32 0.0, %v1392
        %v1394 = vpop.f32.mrf.mxu0
        %v1395 = vpop.f32.mrf.mxu0
        %v1396 = vpop.f32.mrf.mxu0
        %1397 = vdwg.mxu0
        %v1398 = vmul.f32 %v1341, 5.656854
        %v1399 = vmul.f32 %v1393, %v1398
        %v1400 = vadd.f32 %v438, %v1399
        %v1401 = vld [vmem:[%s9] sm:$0x1]
        %v1402 = vld [vmem:[%s10] sm:$0x1]
        %v1403 = vsel %vm441, %v1400, 0.0
        %1404 = vadd.xlane.f32.xlu0 %v1403
        %v1405 = vpop.xlane.xlu0 %1404
        %v1406 = vmul.f32 %v1405, %v445
        %v1407 = vsub.f32 %v1400, %v1406
        %v1408 = vmul.f32 %v1407, %v1407
        %v1409 = vsel %vm441, %v1408, 0.0
        %1410 = vadd.xlane.f32.xlu0 %v1409
        %v1411 = vpop.xlane.xlu0 %1410
        %v1412 = vmul.f32 %v1411, %v445
        %v1413 = vadd.f32 %v1412, 1e-05
        %v1414 = vrsqrt.pop %v1413
        %v1415 = vmul.f32 %v1407, %v1414
        %v1417 = vlaneseq
        %v1418 = vshrl.u32 %v1417, 7
        %v1419 = vsub.s32 0, %v1418
        %v1420 = vrot.slane %v1401, %v1419
        %v1422 = vmul.f32 %v1415, %v1420
        %v1424 = vlaneseq
        %v1425 = vshrl.u32 %v1424, 7
        %v1426 = vsub.s32 0, %v1425
        %v1427 = vrot.slane %v1402, %v1426
        %v1429 = vadd.f32 %v1422, %v1427
        %v1430 = vld [vmem:[%s11] sm:$0xff]
        %v1431 = vld [vmem:[%s11 + $0x8] sm:$0xff]
        %v1432 = vld [vmem:[%s11 + $0x10] sm:$0xff]
        %v1433 = vld [vmem:[%s11 + $0x18] sm:$0xff]
        %v1434 = vld [vmem:[%s12] sm:$0xf]
        %v1435 = vld [vmem:[%s12 + $0x4] sm:$0xf]
        %v1436 = vld [vmem:[%s12 + $0x8] sm:$0xf]
        %v1437 = vld [vmem:[%s12 + $0xc] sm:$0xf]
        %v1438 = vld [vmem:[%s12 + $0x10] sm:$0xf]
        %v1439 = vld [vmem:[%s12 + $0x14] sm:$0xf]
        %v1440 = vld [vmem:[%s12 + $0x18] sm:$0xf]
        %v1441 = vld [vmem:[%s12 + $0x1c] sm:$0xf]
        %v1442 = vld [vmem:[%s12 + $0x20] sm:$0xf]
        %v1443 = vld [vmem:[%s12 + $0x24] sm:$0xf]
        %v1444 = vld [vmem:[%s12 + $0x28] sm:$0xf]
        %v1445 = vld [vmem:[%s12 + $0x2c] sm:$0xf]
        %v1446 = vld [vmem:[%s12 + $0x30] sm:$0xf]
        %v1447 = vld [vmem:[%s12 + $0x34] sm:$0xf]
        %v1448 = vld [vmem:[%s12 + $0x38] sm:$0xf]
        %v1449 = vld [vmem:[%s12 + $0x3c] sm:$0xf]
        %v1450 = vld [vmem:[%s12 + $0x40] sm:$0xf]
        %v1451 = vld [vmem:[%s12 + $0x44] sm:$0xf]
        %v1452 = vld [vmem:[%s12 + $0x48] sm:$0xf]
        %v1453 = vld [vmem:[%s12 + $0x4c] sm:$0xf]
        %v1454 = vld [vmem:[%s12 + $0x50] sm:$0xf]
        %v1455 = vld [vmem:[%s12 + $0x54] sm:$0xf]
        %v1456 = vld [vmem:[%s12 + $0x58] sm:$0xf]
        %v1457 = vld [vmem:[%s12 + $0x5c] sm:$0xf]
        %v1458 = vld [vmem:[%s12 + $0x60] sm:$0xf]
        %v1459 = vld [vmem:[%s12 + $0x64] sm:$0xf]
        %v1460 = vld [vmem:[%s12 + $0x68] sm:$0xf]
        %v1461 = vld [vmem:[%s12 + $0x6c] sm:$0xf]
        %v1462 = vld [vmem:[%s12 + $0x70] sm:$0xf]
        %v1463 = vld [vmem:[%s12 + $0x74] sm:$0xf]
        %v1464 = vld [vmem:[%s12 + $0x78] sm:$0xf]
        %v1465 = vld [vmem:[%s12 + $0x7c] sm:$0xf]
        %v1466 = vpack.c.bf16 %v1429, %v1429
        %v1471 = vunpack.c.l.b16 %v1430
        %v1472 = vunpack.c.h.b16 %v1430
        %v1473 = vunpack.c.l.b16 %v1431
        %v1474 = vunpack.c.h.b16 %v1431
        %v1475 = vunpack.c.l.b16 %v1432
        %v1476 = vunpack.c.h.b16 %v1432
        %v1477 = vunpack.c.l.b16 %v1433
        %v1478 = vunpack.c.h.b16 %v1433
        %v1479 = vpack.c.b16 %v1473, %v1471
        %v1480 = vpack.c.b16 %v1474, %v1472
        %v1481 = vpack.c.b16 %v1477, %v1475
        %v1482 = vpack.c.b16 %v1478, %v1476
        %v1488 = vsel %vm441, %v1466, 0
        %1490 = vmatprep.subr.bf16.mxu0 0
        %1491 = vmatpush1.bf16.msra.mxu0 0
        %1492 = vmatprep.subr.bf16.mxu0 0
        %1493 = vmatpush1.bf16.msra.mxu0 0
        %1494 = vmatprep.subr.bf16.mxu0 0
        %1495 = vmatpush1.bf16.msra.mxu0 0
        %1496 = vmatprep.subr.bf16.mxu0 0
        %1497 = vmatpush1.bf16.msra.mxu0 0
        %1498 = vmatprep.subr.bf16.mxu0 0
        %1499 = vmatpush1.bf16.msra.mxu0 0
        %1500 = vmatprep.subr.bf16.mxu0 0
        %1501 = vmatpush1.bf16.msra.mxu0 0
        %1502 = vmatprep.subr.bf16.mxu0 %v1482
        %1503 = vmatpush1.bf16.msra.mxu0 %v1481
        %1504 = vmatprep.subr.bf16.mxu0 %v1480
        %1505 = vmatpush1.bf16.msra.mxu0 %v1479
        %1506 = vmatprep.subr.bf16.mxu0 0
        %1507 = vmatpush2.bf16.msra.mxu0 0
        %1508 = vmatprep.subr.bf16.mxu0 0
        %1509 = vmatpush2.bf16.msra.mxu0 0
        %1510 = vmatprep.subr.bf16.mxu0 0
        %1511 = vmatpush2.bf16.msra.mxu0 0
        %1512 = vmatprep.subr.bf16.mxu0 0
        %1513 = vmatpush2.bf16.msra.mxu0 0
        %1514 = vmatprep.subr.bf16.mxu0 0
        %1515 = vmatpush2.bf16.msra.mxu0 0
        %1516 = vmatprep.subr.bf16.mxu0 0
        %1517 = vmatpush2.bf16.msra.mxu0 0
        %1518 = vmatprep.subr.bf16.mxu0 0
        %1519 = vmatpush2.bf16.msra.mxu0 0
        %1520 = vmatprep.subr.bf16.mxu0 0
        %1521 = vmatpush2.bf16.msra.mxu0 0
        %1522 = vmatprep.mubr.bf16.mxu0 0
        %1523 = vmatmul.mubr.bf16.gmra.mxu0 %v1488
        %v1524 = vpop.f32.mrf.mxu0
        %v1525 = vadd.f32 0.0, %v1524
        %v1526 = vpop.f32.mrf.mxu0
        %v1527 = vadd.f32 0.0, %v1526
        %v1528 = vpop.f32.mrf.mxu0
        %v1529 = vpop.f32.mrf.mxu0
        %1530 = vdwg.mxu0
        %v1531 = vmul.f32 %v1525, 0.5
        %v1532 = vmul.f32 %v1527, 0.5
        %v1533 = vmul.f32 %v1525, 0.70710677
        %v1534 = vmul.f32 %v1527, 0.70710677
        %vm1535 = vcmp.lt.f32.partialorder %v1533, 0.0
        %vm1536 = vcmp.lt.f32.partialorder %v1534, 0.0
        %v1537 = vsel %vm1535, -1.0, 1.0
        %v1538 = vsel %vm1536, -1.0, 1.0
        %v1539 = vand.u32 2147483647, %v1533
        %v1540 = vand.u32 2147483647, %v1534
        %v1541 = vmul.f32 %v1539, 0.3275911
        %v1542 = vmul.f32 %v1540, 0.3275911
        %v1543 = vadd.f32 %v1541, 1.0
        %v1544 = vadd.f32 %v1542, 1.0
        %v1545 = vrcp.pop %v1543
        %v1546 = vmul.f32 1.0, %v1545
        %v1547 = vrcp.pop %v1544
        %v1548 = vmul.f32 1.0, %v1547
        %v1549 = vmul.f32 %v1546, 1.0614054
        %v1550 = vmul.f32 %v1548, 1.0614054
        %v1551 = vadd.f32 %v1549, -1.4531521
        %v1552 = vadd.f32 %v1550, -1.4531521
        %v1553 = vmul.f32 %v1546, %v1551
        %v1554 = vmul.f32 %v1548, %v1552
        %v1555 = vadd.f32 %v1553, 1.4214138
        %v1556 = vadd.f32 %v1554, 1.4214138
        %v1557 = vmul.f32 %v1546, %v1555
        %v1558 = vmul.f32 %v1548, %v1556
        %v1559 = vadd.f32 %v1557, -0.28449672
        %v1560 = vadd.f32 %v1558, -0.28449672
        %v1561 = vmul.f32 %v1546, %v1559
        %v1562 = vmul.f32 %v1548, %v1560
        %v1563 = vadd.f32 %v1561, 0.2548296
        %v1564 = vadd.f32 %v1562, 0.2548296
        %v1565 = vmul.f32 %v1546, %v1563
        %v1566 = vmul.f32 %v1548, %v1564
        %v1567 = vsub.f32 0.0, %v1539
        %v1568 = vsub.f32 0.0, %v1540
        %v1569 = vmul.f32 %v1567, %v1539
        %v1570 = vmul.f32 %v1568, %v1540
        %v1571 = vmul.f32 %v1569, 1.442695
        %v1572 = vpow.pop %v1571
        %v1573 = vmul.f32 %v1570, 1.442695
        %v1574 = vpow.pop %v1573
        %v1575 = vmul.f32 %v1565, %v1572
        %v1576 = vmul.f32 %v1566, %v1574
        %v1577 = vsub.f32 1.0, %v1575
        %v1578 = vsub.f32 1.0, %v1576
        %v1579 = vmul.f32 %v1537, %v1577
        %v1580 = vmul.f32 %v1538, %v1578
        %v1581 = vadd.f32 %v1579, 1.0
        %v1582 = vadd.f32 %v1580, 1.0
        %v1583 = vmul.f32 %v1531, %v1581
        %v1584 = vmul.f32 %v1532, %v1582
        %v1585 = vmul.f32 %v1583, %v1583
        %v1586 = vmul.f32 %v1584, %v1584
        %v1587 = vadd.f32 %v1585, %v1586
        %1588 = vadd.xlane.f32.xlu0 %v1587
        %v1589 = vpop.xlane.xlu0 %1588
        %v1590 = vadd.f32 %v1589, 1e-12
        %v1591 = vrsqrt.pop %v1590
        %v1592 = vpack.c.bf16 %v1583, %v1583
        %v1593 = vpack.c.bf16 %v1584, %v1584
        %v1626 = vunpack.c.l.b16 %v1434
        %v1627 = vunpack.c.l.b16 %v1435
        %v1628 = vunpack.c.l.b16 %v1436
        %v1629 = vunpack.c.l.b16 %v1437
        %v1630 = vunpack.c.l.b16 %v1438
        %v1631 = vunpack.c.l.b16 %v1439
        %v1632 = vunpack.c.l.b16 %v1440
        %v1633 = vunpack.c.l.b16 %v1441
        %v1634 = vunpack.c.l.b16 %v1442
        %v1635 = vunpack.c.l.b16 %v1443
        %v1636 = vunpack.c.l.b16 %v1444
        %v1637 = vunpack.c.l.b16 %v1445
        %v1638 = vunpack.c.l.b16 %v1446
        %v1639 = vunpack.c.l.b16 %v1447
        %v1640 = vunpack.c.l.b16 %v1448
        %v1641 = vunpack.c.l.b16 %v1449
        %v1642 = vunpack.c.l.b16 %v1450
        %v1643 = vunpack.c.l.b16 %v1451
        %v1644 = vunpack.c.l.b16 %v1452
        %v1645 = vunpack.c.l.b16 %v1453
        %v1646 = vunpack.c.l.b16 %v1454
        %v1647 = vunpack.c.l.b16 %v1455
        %v1648 = vunpack.c.l.b16 %v1456
        %v1649 = vunpack.c.l.b16 %v1457
        %v1650 = vunpack.c.l.b16 %v1458
        %v1651 = vunpack.c.l.b16 %v1459
        %v1652 = vunpack.c.l.b16 %v1460
        %v1653 = vunpack.c.l.b16 %v1461
        %v1654 = vunpack.c.l.b16 %v1462
        %v1655 = vunpack.c.l.b16 %v1463
        %v1656 = vunpack.c.l.b16 %v1464
        %v1657 = vunpack.c.l.b16 %v1465
        %v1658 = vpack.c.b16 %v1627, %v1626
        %v1659 = vpack.c.b16 %v1629, %v1628
        %v1660 = vpack.c.b16 %v1631, %v1630
        %v1661 = vpack.c.b16 %v1633, %v1632
        %v1662 = vpack.c.b16 %v1635, %v1634
        %v1663 = vpack.c.b16 %v1637, %v1636
        %v1664 = vpack.c.b16 %v1639, %v1638
        %v1665 = vpack.c.b16 %v1641, %v1640
        %v1666 = vpack.c.b16 %v1643, %v1642
        %v1667 = vpack.c.b16 %v1645, %v1644
        %v1668 = vpack.c.b16 %v1647, %v1646
        %v1669 = vpack.c.b16 %v1649, %v1648
        %v1670 = vpack.c.b16 %v1651, %v1650
        %v1671 = vpack.c.b16 %v1653, %v1652
        %v1672 = vpack.c.b16 %v1655, %v1654
        %v1673 = vpack.c.b16 %v1657, %v1656
        %1690 = vmatprep.subr.bf16.mxu0 0
        %1691 = vmatpush1.bf16.msra.mxu0 %v1665
        %1692 = vmatprep.subr.bf16.mxu0 0
        %1693 = vmatpush1.bf16.msra.mxu0 %v1664
        %1694 = vmatprep.subr.bf16.mxu0 0
        %1695 = vmatpush1.bf16.msra.mxu0 %v1663
        %1696 = vmatprep.subr.bf16.mxu0 0
        %1697 = vmatpush1.bf16.msra.mxu0 %v1662
        %1698 = vmatprep.subr.bf16.mxu0 0
        %1699 = vmatpush1.bf16.msra.mxu0 %v1661
        %1700 = vmatprep.subr.bf16.mxu0 0
        %1701 = vmatpush1.bf16.msra.mxu0 %v1660
        %1702 = vmatprep.subr.bf16.mxu0 0
        %1703 = vmatpush1.bf16.msra.mxu0 %v1659
        %1704 = vmatprep.subr.bf16.mxu0 0
        %1705 = vmatpush1.bf16.msra.mxu0 %v1658
        %1706 = vmatprep.subr.bf16.mxu0 0
        %1707 = vmatpush2.bf16.msra.mxu0 %v1673
        %1708 = vmatprep.subr.bf16.mxu0 0
        %1709 = vmatpush2.bf16.msra.mxu0 %v1672
        %1710 = vmatprep.subr.bf16.mxu0 0
        %1711 = vmatpush2.bf16.msra.mxu0 %v1671
        %1712 = vmatprep.subr.bf16.mxu0 0
        %1713 = vmatpush2.bf16.msra.mxu0 %v1670
        %1714 = vmatprep.subr.bf16.mxu0 0
        %1715 = vmatpush2.bf16.msra.mxu0 %v1669
        %1716 = vmatprep.subr.bf16.mxu0 0
        %1717 = vmatpush2.bf16.msra.mxu0 %v1668
        %1718 = vmatprep.subr.bf16.mxu0 0
        %1719 = vmatpush2.bf16.msra.mxu0 %v1667
        %1720 = vmatprep.subr.bf16.mxu0 0
        %1721 = vmatpush2.bf16.msra.mxu0 %v1666
        %1722 = vmatprep.mubr.bf16.mxu0 %v1593
        %1723 = vmatmul.mubr.bf16.gmra.mxu0 %v1592
        %v1724 = vpop.f32.mrf.mxu0
        %v1725 = vadd.f32 0.0, %v1724
        %v1726 = vpop.f32.mrf.mxu0
        %v1727 = vpop.f32.mrf.mxu0
        %v1728 = vpop.f32.mrf.mxu0
        %1729 = vdwg.mxu0
        %v1730 = vmul.f32 %v1591, 16.0
        %v1731 = vmul.f32 %v1725, %v1730
        %v1732 = vadd.f32 %v1400, %v1731
        %v1733 = vpack.c.bf16 %v1732, %v1732
        %vm1734 = vcmask 257024
        %1735 = vst.msk [vmem:[%s431] sm:$0xf] %vm1734, %v1733
        %s1736 = sand.u32 %s313, 1
        %s1737 = scalar_lea.sflag [#allocation4], %s1736
        %s1738 = sand.u32 %s313, 1
        %s1739 = smul.addr %s1738, 4
        %s1740 = scalar_lea.vmem [#allocation3], %s1739
        // Predicated region
        $region73: #{tpu_custom_call.1} parent=71 // pred_check
          %p1741 = pneg %p323
        $region74: #{tpu_custom_call.1} parent=71 // pred_check_branch
          %1743 = sbr.rel (%p1741) target = $region76
        $region75: #{tpu_custom_call.1} parent=71 // pred_region
          %s1745 = ssub.s32 64, 64
          %1746 = vsyncadd %s1737, %s1745
          %s1747 = smul.addr %s27, 64
          %s1748 = scalar_lea.hbm %s13, %s1747
          %s1750 = sshll.u32 %s1740, 4
          %s1751 = int_to_ptr.vmem [resolvable:$true] %s1750
          %1753 = dma.vmem_to_hbm [thread:$0]  %s1751, 64, %s1748, %s1737
        $region76: #{tpu_custom_call.1} parent=71 // pred_fallthru
          _
      $region72: #{tpu_custom_call.1} parent=5 // pred_fallthru
        _
      %p1754 = scmp.le.s32.totalorder 2, %s22
      // Predicated region
      $region77: #{tpu_custom_call.1} parent=5 // pred_check
        %p1755 = pneg %p1754
      $region78: #{tpu_custom_call.1} parent=5 // pred_check_branch
        %1757 = sbr.rel (%p1755) target = $region80
      $region79: #{tpu_custom_call.1} parent=5 // pred_region
        %s1758 = ssub.s32 %s22, 2
        // Predicated region
        $region81: #{tpu_custom_call.1} parent=79 // pred_check
          %p1759 = pneg %p329
        $region82: #{tpu_custom_call.1} parent=79 // pred_check_branch
          %1761 = sbr.rel (%p1759) target = $region84
        $region83: #{tpu_custom_call.1} parent=79 // pred_region
          %s1762 = sand.u32 %s314, 1
          %s1763 = scalar_lea.sflag [#allocation4], %s1762
          %s1764 = sand.u32 %s314, 1
          %s1765 = smul.addr %s1764, 4
          %s1766 = scalar_lea.vmem [#allocation3], %s1765
          %1767 = dma.done %s1763, 64
        $region84: #{tpu_custom_call.1} parent=79 // pred_fallthru
          _
      $region80: #{tpu_custom_call.1} parent=5 // pred_fallthru
        _
    $region6: #{tpu_custom_call.1} parent=1 // loop_footer
      %s26 = sadd.s32 1, %s22
    $region7: #{tpu_custom_call.1} parent=1 // loop_footer_branch
      %21 = sbr.rel target = $region3
    $region8: #{tpu_custom_call.1} parent=1 // loop_exit
      _
    %1768 = vsyncpa [#allocation4], 1
    %s1769 = scalar_lea.sflag [#allocation4], 1
    %1770 = vsyncpa %s1769, 1

</llo_original>
